<compile_context>
chip_gen: v5e
topology: v5e:2x2
jax: 0.10.0
libtpu: 0.0.40
codegen_flags: <defaults>
</compile_context>

<pallas_src>
import math
import numpy as np
import jax
import jax.numpy as jnp
from jax.experimental import pallas as pl
from jax.experimental.pallas import tpu as pltpu

BN_EPS = 1e-5
BN_SCALE = 1.0 / math.sqrt(1.0 + BN_EPS)    # eval-mode BN with fresh stats (mean=0, var=1)
LOG2PI = math.log(2.0 * math.pi)
# TODO(synk): BatchNorm layers are modeled in eval mode with freshly-initialized
# running stats (mean=0, var=1, gamma=1, beta=0); training-mode batch statistics
# are not reproduced (they depend on torch's .train()/.eval() state).


# ----------------------------------------------------------------------------- helpers
def _round_up(n, m):
    return ((n + m - 1) // m) * m


def _softplus(x):
    # matches F.softplus numerically (threshold 20)
    return jnp.where(x > 20.0, x, jnp.log1p(jnp.exp(-jnp.abs(x))) + jnp.maximum(x, 0.0))


def _elementwise_dtype():
    # bf16 VPU/EUP exists on v6e/v7x; keep f32 elementwise elsewhere (e.g. v5e).
    try:
        kind = jax.devices()[0].device_kind.lower()
    except Exception:
        return jnp.float32
    if ("v6" in kind) or ("v7" in kind):
        return jnp.bfloat16
    return jnp.float32


# ----------------------------------------------------------------------------- fused kernel
def _make_fused_kernel(D, K, A, obs_dim, out_w, ew_dtype, n_block):
    KA = K * A

    def kern(xa_ref, eps_ref, grp_ref,
             w1, b1, w2, b2, w3, b3, w4, b4, w5, b5,
             zw, zb, dwa, dba, dwb, dbb,
             out_ref):
        f32 = jnp.float32
        bf16 = jnp.bfloat16

        xa = xa_ref[...]                      # (T, IN_W) packed: [act*K | img | pad]
        act_t = xa[:, :KA]                    # (T, K*A), lane offset 0 (no rotate)

        # ---------------- encoder: BN folded into w1 (which is zero-padded so the
        # act/pad lanes of the packed input contribute nothing) -> Tanh x2 -> ReLU x2
        def layer(h, w, b, act_fn):
            y = jnp.dot(h, w[...], preferred_element_type=f32) + b[...]
            return act_fn(y.astype(ew_dtype)).astype(bf16)

        h = layer(xa.astype(bf16), w1, b1, jnp.tanh)
        h = layer(h, w2, b2, jnp.tanh)
        h = layer(h, w3, b3, lambda t: jnp.maximum(t, 0))
        h = layer(h, w4, b4, lambda t: jnp.maximum(t, 0))
        e5 = jnp.dot(h, w5[...], preferred_element_type=f32) + b5[...]     # (T, 2D) f32
        mu = e5[:, :D]                                   # torch.split ordering: mu first
        sigma = _softplus(e5[:, D:]) + 1e-4

        # ---------------- reparameterized sample (eps supplied deterministically)
        z = mu + sigma * eps_ref[...]                    # (T, D) f32

        # ---------------- fused z projection: switching logits | action mu | action
        # std | decoder input layer (BN folded into its weight slice); split by lanes
        zc = jnp.dot(z, zw[...], preferred_element_type=f32) + zb[...]
        logits = zc[:, :K]
        amu = jnp.tanh(zc[:, K:K + KA])
        asig = _softplus(zc[:, K + KA:K + 2 * KA]) + 1e-4
        prev = zc[:, K + 2 * KA:]                        # (T, 28) decoder trunk input

        # per-skill Gaussian log prob of the action target (act pre-tiled in wrapper)
        diff = (act_t - amu) / asig
        elem_lp = -0.5 * diff * diff - jnp.log(asig) - 0.5 * LOG2PI
        lp = jnp.dot(elem_lp, grp_ref[...], preferred_element_type=f32)    # (T, K)

        # mixture responsibilities: single logsumexp
        #   log_softmax(logits) + lp - lse(.) == (logits + lp) - lse(logits + lp)
        unnorm = logits + lp
        umax = jnp.max(unnorm, axis=-1, keepdims=True)
        ulse = umax + jnp.log(jnp.sum(jnp.exp(unnorm - umax), axis=-1, keepdims=True))
        post_lp = unnorm - ulse
        post_p = jnp.exp(post_lp)                        # already normalized

        # ---------------- decoder residual blocks (BN scales folded into weights)
        for i in range(n_block):
            hd = jnp.dot(prev.astype(bf16), dwa[i], preferred_element_type=f32) + dba[i]
            hd = jnp.maximum(hd, 0.0)
            hd = jnp.dot(hd.astype(bf16), dwb[i], preferred_element_type=f32) + dbb[i]
            prev = prev + hd
        dec_mu = prev

        # ---------------- pack everything into one lane-dense slab, single store
        pieces = [mu, sigma, logits, post_lp, post_p, amu, asig, dec_mu]
        used = 2 * D + 3 * K + 2 * KA + obs_dim
        if out_w > used:
            pieces.append(jnp.zeros((xa.shape[0], out_w - used), f32))
        out_ref[...] = jnp.concatenate(pieces, axis=-1)

    return kern


# ----------------------------------------------------------------------------- params
def init_params(key, obs_dim, state_dim, act_dim, n_skill):
    ks = list(jax.random.split(key, 20))
    K, A, D = n_skill, act_dim, state_dim
    KA = K * A
    IN_W = _round_up(KA + obs_dim, 128)      # packed input lane width used by forward()

    def lin(k, din, dout):
        w = jax.random.normal(k, (din, dout), jnp.float32) * (1.0 / math.sqrt(din))
        b = jnp.zeros((1, dout), jnp.float32)
        return w, b

    p = {}
    # encoder: input BN folded into w1, which is zero-padded to the packed-input layout
    w1, b1 = lin(ks[0], obs_dim, 256)
    w1p = jnp.zeros((IN_W, 256), jnp.float32).at[KA:KA + obs_dim, :].set(w1 * BN_SCALE)
    p["e_w1"], p["e_b1"] = w1p.astype(jnp.bfloat16), b1
    for li, k in zip((2, 3, 4), ks[1:4]):
        w, b = lin(k, 256, 256)
        p[f"e_w{li}"], p[f"e_b{li}"] = w.astype(jnp.bfloat16), b
    w5, b5 = lin(ks[4], 256, 2 * D)
    p["e_w5"], p["e_b5"] = w5.astype(jnp.bfloat16), b5

    # fused z projection: switching head | action mu | action std | decoder input layer
    sw_w, sw_b = lin(ks[5], D, K)
    amu_w, amu_b = lin(ks[6], D, KA)
    ast_w, ast_b = lin(ks[7], D, KA)
    d_w0, d_b0 = lin(ks[8], D, 28)
    p["z_w"] = jnp.concatenate([sw_w, amu_w, ast_w, BN_SCALE * d_w0], axis=1)
    p["z_b"] = jnp.concatenate([sw_b, amu_b, ast_b, d_b0], axis=1)

    # decoder residual blocks; the post-Linear BN scales are folded into weights/biases
    was, bas, wbs, bbs = [], [], [], []
    for i in range(3):
        wa, ba = lin(ks[9 + i], 28, 64)
        wb, bb = lin(ks[12 + i], 64, 28)
        was.append((wa * BN_SCALE).astype(jnp.bfloat16)); bas.append(ba * BN_SCALE)
        wbs.append((wb * BN_SCALE).astype(jnp.bfloat16)); bbs.append(bb * BN_SCALE)
    p["d_wa"] = jnp.stack(was); p["d_ba"] = jnp.stack(bas)
    p["d_wb"] = jnp.stack(wbs); p["d_bb"] = jnp.stack(bbs)

    # constant group-sum matrix (K*A, K): sums per-dim action log-probs per skill
    r = np.arange(KA)[:, None]
    c = np.arange(K)[None, :]
    p["grp"] = jnp.asarray(((r >= c * A) & (r < (c + 1) * A)).astype(np.float32))

    # free parameters
    p["log_image_std"] = jnp.ones((1, obs_dim), jnp.float32) * 1.6
    p["gain"] = jax.random.normal(ks[15], (n_skill, act_dim * state_dim), jnp.float32)
    p["states_prior_mu"] = jnp.zeros((1, 1, state_dim), jnp.float32)
    p["states_prior_logstd"] = jnp.ones((1, 1, state_dim), jnp.float32)
    p["goal_mu"] = jax.random.normal(ks[16], (n_skill, state_dim), jnp.float32)
    return p


# ----------------------------------------------------------------------------- forward
def forward(params, img, act, eps):
    B, S, obs_dim = img.shape
    simu = eps.shape[0]
    K, D = params["goal_mu"].shape
    A = act.shape[2] - 1
    KA = K * A
    rows = B * S

    # ---- pack the simu-invariant per-row inputs into ONE lane-dense slab ----
    #      lanes: [ act tiled K times (KA) | img (obs_dim) | zero pad ] -> IN_W
    x = img.astype(jnp.float32).reshape(rows, obs_dim)
    act_sq = jnp.squeeze(act, -1)[:, :, :-1].astype(jnp.float32).reshape(rows, A)
    xa = jnp.concatenate([jnp.tile(act_sq, (1, K)), x], axis=-1)
    in_used = KA + obs_dim
    IN_W = _round_up(in_used, 128)
    used_w = 2 * D + 3 * K + 2 * KA + obs_dim
    OUT_W = _round_up(used_w, 128)

    # ---- row tiling: big tiles to amortize per-step overhead, but guarantee the
    #      grid (simu * row_tiles) has >= 2 steps so "parallel" can use both TCs ----
    TILE_MAX = 1024
    tile = min(TILE_MAX, _round_up(rows, 8))
    if simu * ((_round_up(rows, 8) + tile - 1) // tile) < 2:
        tile = max(8, _round_up((rows + 1) // 2, 8))
    BS_pad = _round_up(rows, tile)
    n_row_tiles = BS_pad // tile
    pad_rows = BS_pad - rows

    if IN_W > in_used:
        xa = jnp.pad(xa, ((0, 0), (0, IN_W - in_used)))
    if pad_rows:
        xa = jnp.pad(xa, ((0, pad_rows), (0, 0)))
    eps3 = eps.astype(jnp.float32).reshape(simu, rows, D)
    if pad_rows:
        eps3 = jnp.pad(eps3, ((0, 0), (0, pad_rows), (0, 0)))

    weights = [
        params["e_w1"], params["e_b1"], params["e_w2"], params["e_b2"],
        params["e_w3"], params["e_b3"], params["e_w4"], params["e_b4"],
        params["e_w5"], params["e_b5"],
        params["z_w"], params["z_b"],
        params["d_wa"], params["d_ba"], params["d_wb"], params["d_bb"],
    ]
    n_block = int(params["d_wa"].shape[0])

    def const_spec(shape):
        nd = len(shape)
        return pl.BlockSpec(shape, lambda s, i, _nd=nd: (0,) * _nd)

    in_specs = ([pl.BlockSpec((tile, IN_W), lambda s, i: (i, 0)),      # simu-invariant
                 pl.BlockSpec((None, tile, D), lambda s, i: (s, i, 0)),  # per-simu eps
                 const_spec(params["grp"].shape)]
                + [const_spec(w.shape) for w in weights])
    out_spec = pl.BlockSpec((None, tile, OUT_W), lambda s, i: (s, i, 0))

    # advisory cost estimate for XLA scheduling
    total_rows = simu * BS_pad
    flops = 2 * total_rows * (IN_W * 256 + 3 * 256 * 256 + 256 * 2 * D
                              + D * (K + 2 * KA + 28) + KA * K
                              + n_block * (28 * 64 + 64 * 28))
    transcendentals = total_rows * (2 * 256 + 2 * D + 2 * KA + K)
    weight_bytes = int(sum(int(np.prod(w.shape)) * w.dtype.itemsize for w in weights))
    bytes_accessed = 4 * (BS_pad * IN_W + total_rows * (D + OUT_W)) + weight_bytes

    packed = pl.pallas_call(
        _make_fused_kernel(D, K, A, obs_dim, OUT_W, _elementwise_dtype(), n_block),
        grid=(simu, n_row_tiles),
        in_specs=in_specs,
        out_specs=out_spec,
        out_shape=jax.ShapeDtypeStruct((simu, BS_pad, OUT_W), jnp.float32),
        compiler_params=pltpu.CompilerParams(
            dimension_semantics=("parallel", "parallel"),   # shards across 2 TCs on v7x
            vmem_limit_bytes=32 * 1024 * 1024),
        cost_estimate=pl.CostEstimate(flops=int(flops),
                                      transcendentals=int(transcendentals),
                                      bytes_accessed=int(bytes_accessed)),
    )(xa, eps3, params["grp"], *weights)

    # ---- unpack the lane-dense slab (wrapper-side slicing = layout plumbing) ----
    c = [0]

    def take(width):
        sl = packed[:, :rows, c[0]:c[0] + width]
        c[0] += width
        return sl

    states_mu = take(D)[0].reshape(B, S, D)        # encoder output identical across simu
    states_sigma = take(D)[0].reshape(B, S, D)
    prior_logits = take(K).reshape(simu, B, S, K)
    post_log_probs = take(K).reshape(simu, B, S, K)
    post_probs = take(K).reshape(simu, B, S, K)
    action_mu = take(KA).reshape(simu, B, S, K, A)
    action_sigma = take(KA).reshape(simu, B, S, K, A)
    image_mu = take(obs_dim).reshape(simu, B, S, obs_dim)

    image_sigma = _softplus(params["log_image_std"]) + 1e-4              # (1, obs_dim)

    # ---- transition matrix in plain XLA (5x5 output; a second pallas_call's launch
    #      overhead exceeds this einsum's cost) ----
    gp = post_probs.reshape(simu * B, S, K)
    a2 = gp[:, :-1, :].reshape(-1, K)
    b2 = gp[:, 1:, :].reshape(-1, K)
    counts = jnp.einsum("nk,nj->kj", a2, b2) + jnp.float32(simu * B)     # +1 per sequence
    transition_mat = counts / jnp.sum(counts, axis=1, keepdims=True)

    goal_mu_bc = jnp.broadcast_to(params["goal_mu"][None, None, None],
                                  (simu, B, S, K, D))
    batch_gain = params["gain"].reshape(1, 1, 1, K, A, D)

    return {
        "latent_action_t": {"mu": action_mu, "sigma": action_sigma},
        "next_pos_posterior": {"mu": states_mu, "sigma": states_sigma},
        "goal_switching_posterior_probs": post_probs,
        "goal_switching_posterior_log_probs": post_log_probs,
        "goal_onehot_idx": post_probs,
        "goal_idx_seq": jnp.argmax(post_probs, axis=-1),
        "goal_seq": goal_mu_bc,
        "states_prior": {"mu": params["states_prior_mu"],
                         "sigma": _softplus(params["states_prior_logstd"])},
        "image_dist": {"mu": image_mu, "sigma": image_sigma},
        "goal_switching_prior": {"logits": prior_logits},
        "batch_gain": batch_gain,
        "transition_mat": transition_mat,
    }


# ----------------------------------------------------------------------------- main
if __name__ == "__main__":
    B, S = 2, 8
    OBS_DIM = 28          # MLPDecoder output is 28 features -> obs_dim must be 28
    STATE_DIM = 6
    ACT_DIM = 4
    N_SKILL = 5
    SIMU = 1

    key = jax.random.PRNGKey(0)
    pkey, ikey, akey, ekey = jax.random.split(key, 4)
    params = init_params(pkey, OBS_DIM, STATE_DIM, ACT_DIM, N_SKILL)

    img = jax.random.normal(ikey, (B, S, OBS_DIM), jnp.float32)
    act = jax.random.normal(akey, (B, S, ACT_DIM + 1, 1), jnp.float32)
    eps = jax.random.normal(ekey, (SIMU, B, S, STATE_DIM), jnp.float32)   # rsample noise

    fwd = jax.jit(forward)
    out = fwd(params, img, act, eps)
    jax.block_until_ready(out)
    print("KERNEL_OK")
</pallas_src>

<mosaic_0001>
module attributes {stable_mosaic.version = 11 : i64} {
  func.func @kern(%arg0: i32, %arg1: i32, %arg2: memref<8x128xf32, #tpu.memory_space<vmem>>, %arg3: memref<1x8x6xf32, #tpu.memory_space<vmem>>, %arg4: memref<20x5xf32, #tpu.memory_space<vmem>>, %arg5: memref<128x256xbf16, #tpu.memory_space<vmem>>, %arg6: memref<1x256xf32, #tpu.memory_space<vmem>>, %arg7: memref<256x256xbf16, #tpu.memory_space<vmem>>, %arg8: memref<1x256xf32, #tpu.memory_space<vmem>>, %arg9: memref<256x256xbf16, #tpu.memory_space<vmem>>, %arg10: memref<1x256xf32, #tpu.memory_space<vmem>>, %arg11: memref<256x256xbf16, #tpu.memory_space<vmem>>, %arg12: memref<1x256xf32, #tpu.memory_space<vmem>>, %arg13: memref<256x12xbf16, #tpu.memory_space<vmem>>, %arg14: memref<1x12xf32, #tpu.memory_space<vmem>>, %arg15: memref<6x73xf32, #tpu.memory_space<vmem>>, %arg16: memref<1x73xf32, #tpu.memory_space<vmem>>, %arg17: memref<3x28x64xbf16, #tpu.memory_space<vmem>>, %arg18: memref<3x1x64xf32, #tpu.memory_space<vmem>>, %arg19: memref<3x64x28xbf16, #tpu.memory_space<vmem>>, %arg20: memref<3x1x28xf32, #tpu.memory_space<vmem>>, %arg21: memref<1x8x128xf32, #tpu.memory_space<vmem>>) attributes {dimension_semantics = [#tpu.dimension_semantics<parallel>, #tpu.dimension_semantics<parallel>], iteration_bounds = array<i64: 1, 2>, scalar_prefetch = 0 : i64, scratch_operands = 0 : i64, tpu.core_type = #tpu.core_type<tc>, window_params = [{transform_indices = @transform_0, window_bounds = array<i64: 8, 128>}, {transform_indices = @transform_1, window_bounds = array<i64: 1, 8, 6>}, {pipeline_mode = #tpu.pipeline_mode<synchronous>, transform_indices = @transform_2, window_bounds = array<i64: 20, 5>}, {pipeline_mode = #tpu.pipeline_mode<synchronous>, transform_indices = @transform_3, window_bounds = array<i64: 128, 256>}, {pipeline_mode = #tpu.pipeline_mode<synchronous>, transform_indices = @transform_4, window_bounds = array<i64: 1, 256>}, {pipeline_mode = #tpu.pipeline_mode<synchronous>, transform_indices = @transform_5, window_bounds = array<i64: 256, 256>}, {pipeline_mode = #tpu.pipeline_mode<synchronous>, transform_indices = @transform_6, window_bounds = array<i64: 1, 256>}, {pipeline_mode = #tpu.pipeline_mode<synchronous>, transform_indices = @transform_7, window_bounds = array<i64: 256, 256>}, {pipeline_mode = #tpu.pipeline_mode<synchronous>, transform_indices = @transform_8, window_bounds = array<i64: 1, 256>}, {pipeline_mode = #tpu.pipeline_mode<synchronous>, transform_indices = @transform_9, window_bounds = array<i64: 256, 256>}, {pipeline_mode = #tpu.pipeline_mode<synchronous>, transform_indices = @transform_10, window_bounds = array<i64: 1, 256>}, {pipeline_mode = #tpu.pipeline_mode<synchronous>, transform_indices = @transform_11, window_bounds = array<i64: 256, 12>}, {pipeline_mode = #tpu.pipeline_mode<synchronous>, transform_indices = @transform_12, window_bounds = array<i64: 1, 12>}, {pipeline_mode = #tpu.pipeline_mode<synchronous>, transform_indices = @transform_13, window_bounds = array<i64: 6, 73>}, {pipeline_mode = #tpu.pipeline_mode<synchronous>, transform_indices = @transform_14, window_bounds = array<i64: 1, 73>}, {pipeline_mode = #tpu.pipeline_mode<synchronous>, transform_indices = @transform_15, window_bounds = array<i64: 3, 28, 64>}, {pipeline_mode = #tpu.pipeline_mode<synchronous>, transform_indices = @transform_16, window_bounds = array<i64: 3, 1, 64>}, {pipeline_mode = #tpu.pipeline_mode<synchronous>, transform_indices = @transform_17, window_bounds = array<i64: 3, 64, 28>}, {pipeline_mode = #tpu.pipeline_mode<synchronous>, transform_indices = @transform_18, window_bounds = array<i64: 3, 1, 28>}, {transform_indices = @transform_19, window_bounds = array<i64: 1, 8, 128>}]} {
    %c0 = arith.constant 0 : index
    %c0_0 = arith.constant 0 : index
    %0 = vector.load %arg2[%c0, %c0_0] : memref<8x128xf32, #tpu.memory_space<vmem>>, vector<8x128xf32>
    %1 = vector.extract_strided_slice %0 {offsets = [0, 0], sizes = [8, 20], strides = [1, 1]} : vector<8x128xf32> to vector<8x20xf32>
    %2 = arith.truncf %0 : vector<8x128xf32> to vector<8x128xbf16>
    %c0_1 = arith.constant 0 : index
    %c0_2 = arith.constant 0 : index
    %3 = vector.load %arg5[%c0_1, %c0_2] : memref<128x256xbf16, #tpu.memory_space<vmem>>, vector<128x256xbf16>
    %cst = arith.constant dense<0.000000e+00> : vector<8x256xf32>
    %4 = tpu.matmul %2, %3, %cst {dimension_numbers = #tpu.dot_dimension_numbers<[1], [0], [0], [1], [0, 0, 1, 1], [], []>} : vector<8x128xbf16>, vector<128x256xbf16>, vector<8x256xf32> -> vector<8x256xf32>
    %c0_3 = arith.constant 0 : index
    %c0_4 = arith.constant 0 : index
    %5 = vector.load %arg6[%c0_3, %c0_4] : memref<1x256xf32, #tpu.memory_space<vmem>>, vector<1x256xf32>
    %6 = vector.broadcast %5 : vector<1x256xf32> to vector<8x256xf32>
    %7 = arith.addf %4, %6 : vector<8x256xf32>
    %8 = math.tanh %7 : vector<8x256xf32>
    %9 = arith.truncf %8 : vector<8x256xf32> to vector<8x256xbf16>
    %c0_5 = arith.constant 0 : index
    %c0_6 = arith.constant 0 : index
    %10 = vector.load %arg7[%c0_5, %c0_6] : memref<256x256xbf16, #tpu.memory_space<vmem>>, vector<256x256xbf16>
    %cst_7 = arith.constant dense<0.000000e+00> : vector<8x256xf32>
    %11 = tpu.matmul %9, %10, %cst_7 {dimension_numbers = #tpu.dot_dimension_numbers<[1], [0], [0], [1], [0, 0, 1, 1], [], []>} : vector<8x256xbf16>, vector<256x256xbf16>, vector<8x256xf32> -> vector<8x256xf32>
    %c0_8 = arith.constant 0 : index
    %c0_9 = arith.constant 0 : index
    %12 = vector.load %arg8[%c0_8, %c0_9] : memref<1x256xf32, #tpu.memory_space<vmem>>, vector<1x256xf32>
    %13 = vector.broadcast %12 : vector<1x256xf32> to vector<8x256xf32>
    %14 = arith.addf %11, %13 : vector<8x256xf32>
    %15 = math.tanh %14 : vector<8x256xf32>
    %16 = arith.truncf %15 : vector<8x256xf32> to vector<8x256xbf16>
    %c0_10 = arith.constant 0 : index
    %c0_11 = arith.constant 0 : index
    %17 = vector.load %arg9[%c0_10, %c0_11] : memref<256x256xbf16, #tpu.memory_space<vmem>>, vector<256x256xbf16>
    %cst_12 = arith.constant dense<0.000000e+00> : vector<8x256xf32>
    %18 = tpu.matmul %16, %17, %cst_12 {dimension_numbers = #tpu.dot_dimension_numbers<[1], [0], [0], [1], [0, 0, 1, 1], [], []>} : vector<8x256xbf16>, vector<256x256xbf16>, vector<8x256xf32> -> vector<8x256xf32>
    %c0_13 = arith.constant 0 : index
    %c0_14 = arith.constant 0 : index
    %19 = vector.load %arg10[%c0_13, %c0_14] : memref<1x256xf32, #tpu.memory_space<vmem>>, vector<1x256xf32>
    %20 = vector.broadcast %19 : vector<1x256xf32> to vector<8x256xf32>
    %21 = arith.addf %18, %20 : vector<8x256xf32>
    %cst_15 = arith.constant 0.000000e+00 : f32
    %22 = vector.broadcast %cst_15 : f32 to vector<8x256xf32>
    %23 = arith.maximumf %21, %22 : vector<8x256xf32>
    %24 = arith.truncf %23 : vector<8x256xf32> to vector<8x256xbf16>
    %c0_16 = arith.constant 0 : index
    %c0_17 = arith.constant 0 : index
    %25 = vector.load %arg11[%c0_16, %c0_17] : memref<256x256xbf16, #tpu.memory_space<vmem>>, vector<256x256xbf16>
    %cst_18 = arith.constant dense<0.000000e+00> : vector<8x256xf32>
    %26 = tpu.matmul %24, %25, %cst_18 {dimension_numbers = #tpu.dot_dimension_numbers<[1], [0], [0], [1], [0, 0, 1, 1], [], []>} : vector<8x256xbf16>, vector<256x256xbf16>, vector<8x256xf32> -> vector<8x256xf32>
    %c0_19 = arith.constant 0 : index
    %c0_20 = arith.constant 0 : index
    %27 = vector.load %arg12[%c0_19, %c0_20] : memref<1x256xf32, #tpu.memory_space<vmem>>, vector<1x256xf32>
    %28 = vector.broadcast %27 : vector<1x256xf32> to vector<8x256xf32>
    %29 = arith.addf %26, %28 : vector<8x256xf32>
    %cst_21 = arith.constant 0.000000e+00 : f32
    %30 = vector.broadcast %cst_21 : f32 to vector<8x256xf32>
    %31 = arith.maximumf %29, %30 : vector<8x256xf32>
    %32 = arith.truncf %31 : vector<8x256xf32> to vector<8x256xbf16>
    %c0_22 = arith.constant 0 : index
    %c0_23 = arith.constant 0 : index
    %33 = vector.load %arg13[%c0_22, %c0_23] : memref<256x12xbf16, #tpu.memory_space<vmem>>, vector<256x12xbf16>
    %cst_24 = arith.constant dense<0.000000e+00> : vector<8x12xf32>
    %34 = tpu.matmul %32, %33, %cst_24 {dimension_numbers = #tpu.dot_dimension_numbers<[1], [0], [0], [1], [0, 0, 1, 1], [], []>} : vector<8x256xbf16>, vector<256x12xbf16>, vector<8x12xf32> -> vector<8x12xf32>
    %c0_25 = arith.constant 0 : index
    %c0_26 = arith.constant 0 : index
    %35 = vector.load %arg14[%c0_25, %c0_26] : memref<1x12xf32, #tpu.memory_space<vmem>>, vector<1x12xf32>
    %36 = vector.broadcast %35 : vector<1x12xf32> to vector<8x12xf32>
    %37 = arith.addf %34, %36 : vector<8x12xf32>
    %38 = vector.extract_strided_slice %37 {offsets = [0, 0], sizes = [8, 6], strides = [1, 1]} : vector<8x12xf32> to vector<8x6xf32>
    %39 = vector.extract_strided_slice %37 {offsets = [0, 6], sizes = [8, 6], strides = [1, 1]} : vector<8x12xf32> to vector<8x6xf32>
    %cst_27 = arith.constant 2.000000e+01 : f32
    %40 = vector.broadcast %cst_27 : f32 to vector<8x6xf32>
    %41 = arith.cmpf ogt, %39, %40 : vector<8x6xf32>
    %42 = math.absf %39 : vector<8x6xf32>
    %cst_28 = arith.constant 0.000000e+00 : f32
    %43 = vector.broadcast %cst_28 : f32 to vector<8x6xf32>
    %44 = arith.subf %43, %42 : vector<8x6xf32>
    %45 = math.exp %44 : vector<8x6xf32>
    %46 = math.log1p %45 : vector<8x6xf32>
    %cst_29 = arith.constant 0.000000e+00 : f32
    %47 = vector.broadcast %cst_29 : f32 to vector<8x6xf32>
    %48 = arith.maximumf %39, %47 : vector<8x6xf32>
    %49 = arith.addf %46, %48 : vector<8x6xf32>
    %50 = arith.select %41, %39, %49 : vector<8x6xi1>, vector<8x6xf32>
    %cst_30 = arith.constant 9.99999974E-5 : f32
    %51 = vector.broadcast %cst_30 : f32 to vector<8x6xf32>
    %52 = arith.addf %50, %51 : vector<8x6xf32>
    %c0_31 = arith.constant 0 : index
    %c0_32 = arith.constant 0 : index
    %c0_33 = arith.constant 0 : index
    %53 = vector.load %arg3[%c0_31, %c0_32, %c0_33] : memref<1x8x6xf32, #tpu.memory_space<vmem>>, vector<1x8x6xf32>
    %54 = vector.shape_cast %53 : vector<1x8x6xf32> to vector<8x6xf32>
    %55 = arith.mulf %52, %54 : vector<8x6xf32>
    %56 = arith.addf %38, %55 : vector<8x6xf32>
    %c0_34 = arith.constant 0 : index
    %c0_35 = arith.constant 0 : index
    %57 = vector.load %arg15[%c0_34, %c0_35] : memref<6x73xf32, #tpu.memory_space<vmem>>, vector<6x73xf32>
    %cst_36 = arith.constant dense<0.000000e+00> : vector<8x73xf32>
    %58 = tpu.matmul %56, %57, %cst_36 {dimension_numbers = #tpu.dot_dimension_numbers<[1], [0], [0], [1], [0, 0, 1, 1], [], []>} : vector<8x6xf32>, vector<6x73xf32>, vector<8x73xf32> -> vector<8x73xf32>
    %c0_37 = arith.constant 0 : index
    %c0_38 = arith.constant 0 : index
    %59 = vector.load %arg16[%c0_37, %c0_38] : memref<1x73xf32, #tpu.memory_space<vmem>>, vector<1x73xf32>
    %60 = vector.broadcast %59 : vector<1x73xf32> to vector<8x73xf32>
    %61 = arith.addf %58, %60 : vector<8x73xf32>
    %62 = vector.extract_strided_slice %61 {offsets = [0, 0], sizes = [8, 5], strides = [1, 1]} : vector<8x73xf32> to vector<8x5xf32>
    %63 = vector.extract_strided_slice %61 {offsets = [0, 5], sizes = [8, 20], strides = [1, 1]} : vector<8x73xf32> to vector<8x20xf32>
    %64 = math.tanh %63 : vector<8x20xf32>
    %65 = vector.extract_strided_slice %61 {offsets = [0, 25], sizes = [8, 20], strides = [1, 1]} : vector<8x73xf32> to vector<8x20xf32>
    %cst_39 = arith.constant 2.000000e+01 : f32
    %66 = vector.broadcast %cst_39 : f32 to vector<8x20xf32>
    %67 = arith.cmpf ogt, %65, %66 : vector<8x20xf32>
    %68 = math.absf %65 : vector<8x20xf32>
    %cst_40 = arith.constant 0.000000e+00 : f32
    %69 = vector.broadcast %cst_40 : f32 to vector<8x20xf32>
    %70 = arith.subf %69, %68 : vector<8x20xf32>
    %71 = math.exp %70 : vector<8x20xf32>
    %72 = math.log1p %71 : vector<8x20xf32>
    %cst_41 = arith.constant 0.000000e+00 : f32
    %73 = vector.broadcast %cst_41 : f32 to vector<8x20xf32>
    %74 = arith.maximumf %65, %73 : vector<8x20xf32>
    %75 = arith.addf %72, %74 : vector<8x20xf32>
    %76 = arith.select %67, %65, %75 : vector<8x20xi1>, vector<8x20xf32>
    %cst_42 = arith.constant 9.99999974E-5 : f32
    %77 = vector.broadcast %cst_42 : f32 to vector<8x20xf32>
    %78 = arith.addf %76, %77 : vector<8x20xf32>
    %79 = vector.extract_strided_slice %61 {offsets = [0, 45], sizes = [8, 28], strides = [1, 1]} : vector<8x73xf32> to vector<8x28xf32>
    %80 = arith.subf %1, %64 : vector<8x20xf32>
    %81 = arith.divf %80, %78 : vector<8x20xf32>
    %cst_43 = arith.constant -5.000000e-01 : f32
    %82 = vector.broadcast %cst_43 : f32 to vector<8x20xf32>
    %83 = arith.mulf %82, %81 : vector<8x20xf32>
    %84 = arith.mulf %83, %81 : vector<8x20xf32>
    %85 = math.log %78 : vector<8x20xf32>
    %86 = arith.subf %84, %85 : vector<8x20xf32>
    %cst_44 = arith.constant 0.918938517 : f32
    %87 = vector.broadcast %cst_44 : f32 to vector<8x20xf32>
    %88 = arith.subf %86, %87 : vector<8x20xf32>
    %c0_45 = arith.constant 0 : index
    %c0_46 = arith.constant 0 : index
    %89 = vector.load %arg4[%c0_45, %c0_46] : memref<20x5xf32, #tpu.memory_space<vmem>>, vector<20x5xf32>
    %cst_47 = arith.constant dense<0.000000e+00> : vector<8x5xf32>
    %90 = tpu.matmul %88, %89, %cst_47 {dimension_numbers = #tpu.dot_dimension_numbers<[1], [0], [0], [1], [0, 0, 1, 1], [], []>} : vector<8x20xf32>, vector<20x5xf32>, vector<8x5xf32> -> vector<8x5xf32>
    %91 = arith.addf %62, %90 : vector<8x5xf32>
    %cst_48 = arith.constant dense<0xFF800000> : vector<8xf32>
    %92 = vector.multi_reduction <maximumf>, %91, %cst_48 [1] : vector<8x5xf32> to vector<8xf32>
    %93 = vector.shape_cast %92 : vector<8xf32> to vector<8x1xf32>
    %94 = vector.broadcast %93 : vector<8x1xf32> to vector<8x5xf32>
    %95 = arith.subf %91, %94 : vector<8x5xf32>
    %96 = math.exp %95 : vector<8x5xf32>
    %cst_49 = arith.constant dense<0.000000e+00> : vector<8xf32>
    %97 = vector.multi_reduction <add>, %96, %cst_49 [1] : vector<8x5xf32> to vector<8xf32>
    %98 = vector.shape_cast %97 : vector<8xf32> to vector<8x1xf32>
    %99 = math.log %98 : vector<8x1xf32>
    %100 = arith.addf %93, %99 : vector<8x1xf32>
    %101 = vector.broadcast %100 : vector<8x1xf32> to vector<8x5xf32>
    %102 = arith.subf %91, %101 : vector<8x5xf32>
    %103 = math.exp %102 : vector<8x5xf32>
    %104 = arith.truncf %79 : vector<8x28xf32> to vector<8x28xbf16>
    %c0_50 = arith.constant 0 : index
    %c0_51 = arith.constant 0 : index
    %c0_52 = arith.constant 0 : index
    %105 = vector.load %arg17[%c0_50, %c0_51, %c0_52] : memref<3x28x64xbf16, #tpu.memory_space<vmem>>, vector<1x28x64xbf16>
    %106 = vector.shape_cast %105 : vector<1x28x64xbf16> to vector<28x64xbf16>
    %cst_53 = arith.constant dense<0.000000e+00> : vector<8x64xf32>
    %107 = tpu.matmul %104, %106, %cst_53 {dimension_numbers = #tpu.dot_dimension_numbers<[1], [0], [0], [1], [0, 0, 1, 1], [], []>} : vector<8x28xbf16>, vector<28x64xbf16>, vector<8x64xf32> -> vector<8x64xf32>
    %c0_54 = arith.constant 0 : index
    %c0_55 = arith.constant 0 : index
    %c0_56 = arith.constant 0 : index
    %108 = vector.load %arg18[%c0_54, %c0_55, %c0_56] : memref<3x1x64xf32, #tpu.memory_space<vmem>>, vector<1x1x64xf32>
    %109 = vector.shape_cast %108 : vector<1x1x64xf32> to vector<1x64xf32>
    %110 = vector.broadcast %109 : vector<1x64xf32> to vector<8x64xf32>
    %111 = arith.addf %107, %110 : vector<8x64xf32>
    %cst_57 = arith.constant 0.000000e+00 : f32
    %112 = vector.broadcast %cst_57 : f32 to vector<8x64xf32>
    %113 = arith.maximumf %111, %112 : vector<8x64xf32>
    %114 = arith.truncf %113 : vector<8x64xf32> to vector<8x64xbf16>
    %c0_58 = arith.constant 0 : index
    %c0_59 = arith.constant 0 : index
    %c0_60 = arith.constant 0 : index
    %115 = vector.load %arg19[%c0_58, %c0_59, %c0_60] : memref<3x64x28xbf16, #tpu.memory_space<vmem>>, vector<1x64x28xbf16>
    %116 = vector.shape_cast %115 : vector<1x64x28xbf16> to vector<64x28xbf16>
    %cst_61 = arith.constant dense<0.000000e+00> : vector<8x28xf32>
    %117 = tpu.matmul %114, %116, %cst_61 {dimension_numbers = #tpu.dot_dimension_numbers<[1], [0], [0], [1], [0, 0, 1, 1], [], []>} : vector<8x64xbf16>, vector<64x28xbf16>, vector<8x28xf32> -> vector<8x28xf32>
    %c0_62 = arith.constant 0 : index
    %c0_63 = arith.constant 0 : index
    %c0_64 = arith.constant 0 : index
    %118 = vector.load %arg20[%c0_62, %c0_63, %c0_64] : memref<3x1x28xf32, #tpu.memory_space<vmem>>, vector<1x1x28xf32>
    %119 = vector.shape_cast %118 : vector<1x1x28xf32> to vector<1x28xf32>
    %120 = vector.broadcast %119 : vector<1x28xf32> to vector<8x28xf32>
    %121 = arith.addf %117, %120 : vector<8x28xf32>
    %122 = arith.addf %79, %121 : vector<8x28xf32>
    %123 = arith.truncf %122 : vector<8x28xf32> to vector<8x28xbf16>
    %c1 = arith.constant 1 : index
    %c0_65 = arith.constant 0 : index
    %c0_66 = arith.constant 0 : index
    %124 = vector.load %arg17[%c1, %c0_65, %c0_66] : memref<3x28x64xbf16, #tpu.memory_space<vmem>>, vector<1x28x64xbf16>
    %125 = vector.shape_cast %124 : vector<1x28x64xbf16> to vector<28x64xbf16>
    %cst_67 = arith.constant dense<0.000000e+00> : vector<8x64xf32>
    %126 = tpu.matmul %123, %125, %cst_67 {dimension_numbers = #tpu.dot_dimension_numbers<[1], [0], [0], [1], [0, 0, 1, 1], [], []>} : vector<8x28xbf16>, vector<28x64xbf16>, vector<8x64xf32> -> vector<8x64xf32>
    %c1_68 = arith.constant 1 : index
    %c0_69 = arith.constant 0 : index
    %c0_70 = arith.constant 0 : index
    %127 = vector.load %arg18[%c1_68, %c0_69, %c0_70] : memref<3x1x64xf32, #tpu.memory_space<vmem>>, vector<1x1x64xf32>
    %128 = vector.shape_cast %127 : vector<1x1x64xf32> to vector<1x64xf32>
    %129 = vector.broadcast %128 : vector<1x64xf32> to vector<8x64xf32>
    %130 = arith.addf %126, %129 : vector<8x64xf32>
    %cst_71 = arith.constant 0.000000e+00 : f32
    %131 = vector.broadcast %cst_71 : f32 to vector<8x64xf32>
    %132 = arith.maximumf %130, %131 : vector<8x64xf32>
    %133 = arith.truncf %132 : vector<8x64xf32> to vector<8x64xbf16>
    %c1_72 = arith.constant 1 : index
    %c0_73 = arith.constant 0 : index
    %c0_74 = arith.constant 0 : index
    %134 = vector.load %arg19[%c1_72, %c0_73, %c0_74] : memref<3x64x28xbf16, #tpu.memory_space<vmem>>, vector<1x64x28xbf16>
    %135 = vector.shape_cast %134 : vector<1x64x28xbf16> to vector<64x28xbf16>
    %cst_75 = arith.constant dense<0.000000e+00> : vector<8x28xf32>
    %136 = tpu.matmul %133, %135, %cst_75 {dimension_numbers = #tpu.dot_dimension_numbers<[1], [0], [0], [1], [0, 0, 1, 1], [], []>} : vector<8x64xbf16>, vector<64x28xbf16>, vector<8x28xf32> -> vector<8x28xf32>
    %c1_76 = arith.constant 1 : index
    %c0_77 = arith.constant 0 : index
    %c0_78 = arith.constant 0 : index
    %137 = vector.load %arg20[%c1_76, %c0_77, %c0_78] : memref<3x1x28xf32, #tpu.memory_space<vmem>>, vector<1x1x28xf32>
    %138 = vector.shape_cast %137 : vector<1x1x28xf32> to vector<1x28xf32>
    %139 = vector.broadcast %138 : vector<1x28xf32> to vector<8x28xf32>
    %140 = arith.addf %136, %139 : vector<8x28xf32>
    %141 = arith.addf %122, %140 : vector<8x28xf32>
    %142 = arith.truncf %141 : vector<8x28xf32> to vector<8x28xbf16>
    %c2 = arith.constant 2 : index
    %c0_79 = arith.constant 0 : index
    %c0_80 = arith.constant 0 : index
    %143 = vector.load %arg17[%c2, %c0_79, %c0_80] : memref<3x28x64xbf16, #tpu.memory_space<vmem>>, vector<1x28x64xbf16>
    %144 = vector.shape_cast %143 : vector<1x28x64xbf16> to vector<28x64xbf16>
    %cst_81 = arith.constant dense<0.000000e+00> : vector<8x64xf32>
    %145 = tpu.matmul %142, %144, %cst_81 {dimension_numbers = #tpu.dot_dimension_numbers<[1], [0], [0], [1], [0, 0, 1, 1], [], []>} : vector<8x28xbf16>, vector<28x64xbf16>, vector<8x64xf32> -> vector<8x64xf32>
    %c2_82 = arith.constant 2 : index
    %c0_83 = arith.constant 0 : index
    %c0_84 = arith.constant 0 : index
    %146 = vector.load %arg18[%c2_82, %c0_83, %c0_84] : memref<3x1x64xf32, #tpu.memory_space<vmem>>, vector<1x1x64xf32>
    %147 = vector.shape_cast %146 : vector<1x1x64xf32> to vector<1x64xf32>
    %148 = vector.broadcast %147 : vector<1x64xf32> to vector<8x64xf32>
    %149 = arith.addf %145, %148 : vector<8x64xf32>
    %cst_85 = arith.constant 0.000000e+00 : f32
    %150 = vector.broadcast %cst_85 : f32 to vector<8x64xf32>
    %151 = arith.maximumf %149, %150 : vector<8x64xf32>
    %152 = arith.truncf %151 : vector<8x64xf32> to vector<8x64xbf16>
    %c2_86 = arith.constant 2 : index
    %c0_87 = arith.constant 0 : index
    %c0_88 = arith.constant 0 : index
    %153 = vector.load %arg19[%c2_86, %c0_87, %c0_88] : memref<3x64x28xbf16, #tpu.memory_space<vmem>>, vector<1x64x28xbf16>
    %154 = vector.shape_cast %153 : vector<1x64x28xbf16> to vector<64x28xbf16>
    %cst_89 = arith.constant dense<0.000000e+00> : vector<8x28xf32>
    %155 = tpu.matmul %152, %154, %cst_89 {dimension_numbers = #tpu.dot_dimension_numbers<[1], [0], [0], [1], [0, 0, 1, 1], [], []>} : vector<8x64xbf16>, vector<64x28xbf16>, vector<8x28xf32> -> vector<8x28xf32>
    %c2_90 = arith.constant 2 : index
    %c0_91 = arith.constant 0 : index
    %c0_92 = arith.constant 0 : index
    %156 = vector.load %arg20[%c2_90, %c0_91, %c0_92] : memref<3x1x28xf32, #tpu.memory_space<vmem>>, vector<1x1x28xf32>
    %157 = vector.shape_cast %156 : vector<1x1x28xf32> to vector<1x28xf32>
    %158 = vector.broadcast %157 : vector<1x28xf32> to vector<8x28xf32>
    %159 = arith.addf %155, %158 : vector<8x28xf32>
    %160 = arith.addf %141, %159 : vector<8x28xf32>
    %cst_93 = arith.constant 0.000000e+00 : f32
    %161 = vector.broadcast %cst_93 : f32 to vector<8x33xf32>
    %162 = tpu.concatenate %38, %52, %62, %102, %103, %64, %78, %160, %161 in 1 : vector<8x6xf32>, vector<8x6xf32>, vector<8x5xf32>, vector<8x5xf32>, vector<8x5xf32>, vector<8x20xf32>, vector<8x20xf32>, vector<8x28xf32>, vector<8x33xf32> -> vector<8x128xf32>
    %c0_94 = arith.constant 0 : index
    %c0_95 = arith.constant 0 : index
    %c0_96 = arith.constant 0 : index
    %163 = vector.load %arg21[%c0_94, %c0_95, %c0_96] : memref<1x8x128xf32, #tpu.memory_space<vmem>>, vector<1x8x128xf32>
    %164 = vector.shape_cast %163 : vector<1x8x128xf32> to vector<8x128xf32>
    %165 = vector.shape_cast %162 : vector<8x128xf32> to vector<1x8x128xf32>
    tpu.vector_store %arg21[%c0_94, %c0_95, %c0_96], %165 {strides = array<i32>} : memref<1x8x128xf32, #tpu.memory_space<vmem>>, vector<1x8x128xf32>,
    return
  }
  func.func @transform_0(%arg0: i32, %arg1: i32) -> (i32, i32) {
    %c0_i32 = arith.constant 0 : i32
    %c0_i32_0 = arith.constant 0 : i32
    return %arg1, %c0_i32 : i32, i32
  }
  func.func @transform_1(%arg0: i32, %arg1: i32) -> (i32, i32, i32) {
    %c0_i32 = arith.constant 0 : i32
    %c0_i32_0 = arith.constant 0 : i32
    return %arg0, %arg1, %c0_i32 : i32, i32, i32
  }
  func.func @transform_2(%arg0: i32, %arg1: i32) -> (i32, i32) {
    %c0_i32 = arith.constant 0 : i32
    %c0_i32_0 = arith.constant 0 : i32
    %c0_i32_1 = arith.constant 0 : i32
    return %c0_i32, %c0_i32_0 : i32, i32
  }
  func.func @transform_3(%arg0: i32, %arg1: i32) -> (i32, i32) {
    %c0_i32 = arith.constant 0 : i32
    %c0_i32_0 = arith.constant 0 : i32
    %c0_i32_1 = arith.constant 0 : i32
    return %c0_i32, %c0_i32_0 : i32, i32
  }
  func.func @transform_4(%arg0: i32, %arg1: i32) -> (i32, i32) {
    %c0_i32 = arith.constant 0 : i32
    %c0_i32_0 = arith.constant 0 : i32
    %c0_i32_1 = arith.constant 0 : i32
    return %c0_i32, %c0_i32_0 : i32, i32
  }
  func.func @transform_5(%arg0: i32, %arg1: i32) -> (i32, i32) {
    %c0_i32 = arith.constant 0 : i32
    %c0_i32_0 = arith.constant 0 : i32
    %c0_i32_1 = arith.constant 0 : i32
    return %c0_i32, %c0_i32_0 : i32, i32
  }
  func.func @transform_6(%arg0: i32, %arg1: i32) -> (i32, i32) {
    %c0_i32 = arith.constant 0 : i32
    %c0_i32_0 = arith.constant 0 : i32
    %c0_i32_1 = arith.constant 0 : i32
    return %c0_i32, %c0_i32_0 : i32, i32
  }
  func.func @transform_7(%arg0: i32, %arg1: i32) -> (i32, i32) {
    %c0_i32 = arith.constant 0 : i32
    %c0_i32_0 = arith.constant 0 : i32
    %c0_i32_1 = arith.constant 0 : i32
    return %c0_i32, %c0_i32_0 : i32, i32
  }
  func.func @transform_8(%arg0: i32, %arg1: i32) -> (i32, i32) {
    %c0_i32 = arith.constant 0 : i32
    %c0_i32_0 = arith.constant 0 : i32
    %c0_i32_1 = arith.constant 0 : i32
    return %c0_i32, %c0_i32_0 : i32, i32
  }
  func.func @transform_9(%arg0: i32, %arg1: i32) -> (i32, i32) {
    %c0_i32 = arith.constant 0 : i32
    %c0_i32_0 = arith.constant 0 : i32
    %c0_i32_1 = arith.constant 0 : i32
    return %c0_i32, %c0_i32_0 : i32, i32
  }
  func.func @transform_10(%arg0: i32, %arg1: i32) -> (i32, i32) {
    %c0_i32 = arith.constant 0 : i32
    %c0_i32_0 = arith.constant 0 : i32
    %c0_i32_1 = arith.constant 0 : i32
    return %c0_i32, %c0_i32_0 : i32, i32
  }
  func.func @transform_11(%arg0: i32, %arg1: i32) -> (i32, i32) {
    %c0_i32 = arith.constant 0 : i32
    %c0_i32_0 = arith.constant 0 : i32
    %c0_i32_1 = arith.constant 0 : i32
    return %c0_i32, %c0_i32_0 : i32, i32
  }
  func.func @transform_12(%arg0: i32, %arg1: i32) -> (i32, i32) {
    %c0_i32 = arith.constant 0 : i32
    %c0_i32_0 = arith.constant 0 : i32
    %c0_i32_1 = arith.constant 0 : i32
    return %c0_i32, %c0_i32_0 : i32, i32
  }
  func.func @transform_13(%arg0: i32, %arg1: i32) -> (i32, i32) {
    %c0_i32 = arith.constant 0 : i32
    %c0_i32_0 = arith.constant 0 : i32
    %c0_i32_1 = arith.constant 0 : i32
    return %c0_i32, %c0_i32_0 : i32, i32
  }
  func.func @transform_14(%arg0: i32, %arg1: i32) -> (i32, i32) {
    %c0_i32 = arith.constant 0 : i32
    %c0_i32_0 = arith.constant 0 : i32
    %c0_i32_1 = arith.constant 0 : i32
    return %c0_i32, %c0_i32_0 : i32, i32
  }
  func.func @transform_15(%arg0: i32, %arg1: i32) -> (i32, i32, i32) {
    %c0_i32 = arith.constant 0 : i32
    %c0_i32_0 = arith.constant 0 : i32
    %c0_i32_1 = arith.constant 0 : i32
    %c0_i32_2 = arith.constant 0 : i32
    return %c0_i32, %c0_i32_0, %c0_i32_1 : i32, i32, i32
  }
  func.func @transform_16(%arg0: i32, %arg1: i32) -> (i32, i32, i32) {
    %c0_i32 = arith.constant 0 : i32
    %c0_i32_0 = arith.constant 0 : i32
    %c0_i32_1 = arith.constant 0 : i32
    %c0_i32_2 = arith.constant 0 : i32
    return %c0_i32, %c0_i32_0, %c0_i32_1 : i32, i32, i32
  }
  func.func @transform_17(%arg0: i32, %arg1: i32) -> (i32, i32, i32) {
    %c0_i32 = arith.constant 0 : i32
    %c0_i32_0 = arith.constant 0 : i32
    %c0_i32_1 = arith.constant 0 : i32
    %c0_i32_2 = arith.constant 0 : i32
    return %c0_i32, %c0_i32_0, %c0_i32_1 : i32, i32, i32
  }
  func.func @transform_18(%arg0: i32, %arg1: i32) -> (i32, i32, i32) {
    %c0_i32 = arith.constant 0 : i32
    %c0_i32_0 = arith.constant 0 : i32
    %c0_i32_1 = arith.constant 0 : i32
    %c0_i32_2 = arith.constant 0 : i32
    return %c0_i32, %c0_i32_0, %c0_i32_1 : i32, i32, i32
  }
  func.func @transform_19(%arg0: i32, %arg1: i32) -> (i32, i32, i32) {
    %c0_i32 = arith.constant 0 : i32
    %c0_i32_0 = arith.constant 0 : i32
    return %arg0, %arg1, %c0_i32 : i32, i32, i32
  }
}

</mosaic_0001>

<llo_original>
// kernel: tile.7
$region0: #{tile.7}
  %s0 = inlined_call_operand.vmem [shape: f32[16,5,4], index: 0, kind: input, shape index: {}]
  %s1 = inlined_call_operand.vmem [shape: f32[16,20], index: 1, kind: output, shape index: {}]
  $region1: #{tile.7} parent=0
    #allocation0 [shape = 'u8[20480]{0}', space=vmem, size = 0x5000, scoped, tag = 'scoped mem for input reshape']
    %s3 = ssub.s32 16, 1
    %s4 = scalar_lea.vmem %s0, 16
    %v5 = vld [vmem:[%s4] sm:%s3]
    %s6 = scalar_lea.vmem [#allocation0], 32
    %7 = vst [vmem:[%s6] sm:%s3] %v5
    %s8 = scalar_lea.vmem %s0, 12
    %v9 = vld [vmem:[%s8] sm:%s3]
    %s10 = scalar_lea.vmem [#allocation0], 24
    %11 = vst [vmem:[%s10] sm:%s3] %v9
    %s12 = scalar_lea.vmem %s0, 8
    %v13 = vld [vmem:[%s12] sm:%s3]
    %s14 = scalar_lea.vmem [#allocation0], 16
    %15 = vst [vmem:[%s14] sm:%s3] %v13
    %s16 = scalar_lea.vmem %s0, 4
    %v17 = vld [vmem:[%s16] sm:%s3]
    %s18 = scalar_lea.vmem [#allocation0], 8
    %19 = vst [vmem:[%s18] sm:%s3] %v17
    %v20 = vld [vmem:[%s0] sm:%s3]
    %21 = vst [vmem:[#allocation0] sm:%s3] %v20
    %v22 = vld [vmem:[#allocation0] sm:$0xf]
    %vm23 = vcmask 130048
    %24 = vst.msk [vmem:[%s1] sm:$0xf] %vm23, %v22
    %s25 = scalar_lea.vmem [#allocation0], 8
    %v26 = vld [vmem:[%s25] sm:$0xf]
    %vm27 = vcmask 130048
    %s28 = scalar_lea.vmem %s1, 4
    %29 = vst.msk [vmem:[%s28] sm:$0xf] %vm27, %v26
    %s30 = scalar_lea.vmem [#allocation0], 16
    %v31 = vld [vmem:[%s30] sm:$0xf]
    %vm32 = vcmask 130048
    %s33 = scalar_lea.vmem %s1, 8
    %34 = vst.msk [vmem:[%s33] sm:$0xf] %vm32, %v31
    %s35 = scalar_lea.vmem [#allocation0], 24
    %v36 = vld [vmem:[%s35] sm:$0xf]
    %vm37 = vcmask 130048
    %s38 = scalar_lea.vmem %s1, 12
    %39 = vst.msk [vmem:[%s38] sm:$0xf] %vm37, %v36
    %s40 = scalar_lea.vmem [#allocation0], 32
    %v41 = vld [vmem:[%s40] sm:$0xf]
    %vm42 = vcmask 130048
    %s43 = scalar_lea.vmem %s1, 16
    %44 = vst.msk [vmem:[%s43] sm:$0xf] %vm42, %v41

// kernel: forward.1
$region0: #{forward.1}
  #allocation0 [shape = 'u32[]', space=smem, size = 0x4, offset = 0x4, fixed_abs, tag = 'smem constant byte address 0x4 - core index']
  #allocation1 [shape = 'u32[72,128]{1,0:T(1,128)}', space=vmem, size = 0x9000, scoped, tag = 'internal scratch']
  %s0 = inlined_call_operand.vmem [shape: f32[16,128], index: 0, kind: input, shape index: {}]
  %s1 = inlined_call_operand.vmem [shape: f32[1,16,6], index: 1, kind: input, shape index: {}]
  %s2 = inlined_call_operand.vmem [shape: f32[20,5], index: 2, kind: input, shape index: {}]
  %s3 = inlined_call_operand.hbm [shape: bf16[128,256], index: 3, kind: input, shape index: {}]
  %s4 = inlined_call_operand.hbm [shape: f32[1,256], index: 4, kind: input, shape index: {}]
  %s5 = inlined_call_operand.vmem [shape: bf16[256,256], index: 5, kind: input, shape index: {}]
  %s6 = inlined_call_operand.hbm [shape: f32[1,256], index: 6, kind: input, shape index: {}]
  %s7 = inlined_call_operand.vmem [shape: bf16[256,256], index: 7, kind: input, shape index: {}]
  %s8 = inlined_call_operand.hbm [shape: f32[1,256], index: 8, kind: input, shape index: {}]
  %s9 = inlined_call_operand.hbm [shape: bf16[256,256], index: 9, kind: input, shape index: {}]
  %s10 = inlined_call_operand.hbm [shape: f32[1,256], index: 10, kind: input, shape index: {}]
  %s11 = inlined_call_operand.vmem [shape: bf16[256,12], index: 11, kind: input, shape index: {}]
  %s12 = inlined_call_operand.hbm [shape: f32[1,12], index: 12, kind: input, shape index: {}]
  %s13 = inlined_call_operand.hbm [shape: f32[6,73], index: 13, kind: input, shape index: {}]
  %s14 = inlined_call_operand.hbm [shape: f32[1,73], index: 14, kind: input, shape index: {}]
  %s15 = inlined_call_operand.hbm [shape: bf16[3,28,64], index: 15, kind: input, shape index: {}]
  %s16 = inlined_call_operand.hbm [shape: f32[3,1,64], index: 16, kind: input, shape index: {}]
  %s17 = inlined_call_operand.vmem [shape: bf16[3,64,28], index: 17, kind: input, shape index: {}]
  %s18 = inlined_call_operand.hbm [shape: f32[3,1,28], index: 18, kind: input, shape index: {}]
  %s19 = inlined_call_operand.vmem [shape: f32[1,16,128], index: 19, kind: output, shape index: {}]
  %s20 = sld [smem:[#allocation0]]
  $region157: #{forward.1} parent=0
    _
  %s22 = ssub.s32 1, %s20
  %s23 = scalar_select 0, %s22, %s20
  $region1: #{forward.1} parent=0
    #allocation2 [shape = 'u8[65536]{0}', space=vmem, size = 0x10000, scoped, tag = 'input window, operand 3, single buffered']
    #allocation3 [shape = 's32[2]{0}', space=sflag, size = 0x8, scoped, tag = 'scoped memory for forward.1']
    #allocation4 [shape = 'u8[1024]{0}', space=vmem, size = 0x400, scoped, tag = 'input window, operand 4, single buffered']
    #allocation5 [shape = 's32[1]{0}', space=sflag, size = 0x4, scoped, tag = 'scoped memory for forward.1']
    #allocation6 [shape = 'u8[1024]{0}', space=vmem, size = 0x400, scoped, tag = 'input window, operand 6, single buffered']
    #allocation7 [shape = 'u8[1024]{0}', space=vmem, size = 0x400, scoped, tag = 'input window, operand 8, single buffered']
    #allocation8 [shape = 's32[1]{0}', space=sflag, size = 0x4, scoped, tag = 'scoped memory for forward.1']
    #allocation9 [shape = 'u8[131072]{0}', space=vmem, size = 0x20000, scoped, tag = 'input window, operand 9, single buffered']
    #allocation10 [shape = 'u8[1024]{0}', space=vmem, size = 0x400, scoped, tag = 'input window, operand 10, single buffered']
    #allocation11 [shape = 's32[1]{0}', space=sflag, size = 0x4, scoped, tag = 'scoped memory for forward.1']
    #allocation12 [shape = 'u8[512]{0}', space=vmem, size = 0x400, scoped, tag = 'input window, operand 12, single buffered']
    #allocation13 [shape = 'u8[4096]{0}', space=vmem, size = 0x1000, scoped, tag = 'input window, operand 13, single buffered']
    #allocation14 [shape = 's32[1]{0}', space=sflag, size = 0x4, scoped, tag = 'scoped memory for forward.1']
    #allocation15 [shape = 'u8[512]{0}', space=vmem, size = 0x400, scoped, tag = 'input window, operand 14, single buffered']
    #allocation16 [shape = 'u8[24576]{0}', space=vmem, size = 0x6000, scoped, tag = 'input window, operand 15, single buffered']
    #allocation17 [shape = 's32[1]{0}', space=sflag, size = 0x4, scoped, tag = 'scoped memory for forward.1']
    #allocation18 [shape = 'u8[1536]{0}', space=vmem, size = 0x800, scoped, tag = 'input window, operand 16, single buffered']
    #allocation19 [shape = 'u8[1536]{0}', space=vmem, size = 0x800, scoped, tag = 'input window, operand 18, single buffered']
    #allocation20 [shape = 's32[1]{0}', space=sflag, size = 0x4, scoped, tag = 'scoped memory for forward.1']
    %24 = vsyncpa [#allocation3], 0
    %25 = vsyncpa [#allocation5], 0
    %26 = vsyncpa [#allocation8], 0
    %27 = vsyncpa [#allocation11], 0
    %28 = vsyncpa [#allocation14], 0
    %29 = vsyncpa [#allocation17], 0
    %30 = vsyncpa [#allocation20], 0
    loop: start=0, step=1, limit=4
    $region2: #{forward.1} parent=1 // loop_pre_header
      _
    $region3: #{forward.1} parent=1 // loop_header
      %s32 = sphi 0, %s36
      %p33 = scmp.ge.s32.totalorder %s32, 4
      %s39 = sphi 0, %s51
      %s40 = sphi 0, %s47
      %s41 = sphi 0, %s39
      %s42 = sphi 0, %s40
      %s43 = sphi 0, %s41
      %s44 = sphi 0, %s42
      %s54 = sphi 0, %s56
      %s57 = sphi 0, %s54
      %s58 = sphi 0, %s57
      %s74 = sphi 0, %s58
      %s82 = sphi 0, %s84
      %s85 = sphi 0, %s82
      %s86 = sphi 0, %s85
      %s102 = sphi 0, %s86
      %s106 = sphi 0, %s106
      %s108 = sphi 0, %s106
      %s109 = sphi 0, %s108
      %s123 = sphi 0, %s109
      %s127 = sphi 0, %s127
      %s129 = sphi 0, %s127
      %s130 = sphi 0, %s129
      %s144 = sphi 0, %s130
      %s148 = sphi 0, %s148
      %s150 = sphi 0, %s148
      %s151 = sphi 0, %s150
      %s165 = sphi 0, %s151
      %s169 = sphi 0, %s169
      %s171 = sphi 0, %s169
      %s172 = sphi 0, %s171
      %s186 = sphi 0, %s172
      %s190 = sphi 0, %s190
      %s192 = sphi 0, %s190
      %s193 = sphi 0, %s192
      %s207 = sphi 0, %s193
      %s211 = sphi 0, %s211
      %s213 = sphi 0, %s211
      %s214 = sphi 0, %s213
      %s228 = sphi 0, %s214
      %s232 = sphi 0, %s232
      %s234 = sphi 0, %s232
      %s235 = sphi 0, %s234
      %s249 = sphi 0, %s235
      %s253 = sphi 0, %s253
      %s255 = sphi 0, %s253
      %s256 = sphi 0, %s255
      %s270 = sphi 0, %s256
      %s274 = sphi 0, %s274
      %s276 = sphi 0, %s274
      %s277 = sphi 0, %s276
      %s291 = sphi 0, %s277
      %s295 = sphi 0, %s295
      %s297 = sphi 0, %s295
      %s298 = sphi 0, %s297
      %s312 = sphi 0, %s298
      %s316 = sphi 0, %s316
      %s318 = sphi 0, %s316
      %s319 = sphi 0, %s318
      %s333 = sphi 0, %s319
      %s337 = sphi 0, %s337
      %s339 = sphi 0, %s337
      %s340 = sphi 0, %s339
      %s354 = sphi 0, %s340
      %s358 = sphi 0, %s358
      %s360 = sphi 0, %s358
      %s361 = sphi 0, %s360
      %s375 = sphi 0, %s361
      %s379 = sphi 0, %s379
      %s381 = sphi 0, %s379
      %s382 = sphi 0, %s381
      %s396 = sphi 0, %s382
      %s400 = sphi 0, %s400
      %s402 = sphi 0, %s400
      %s403 = sphi 0, %s402
      %s417 = sphi 0, %s403
      %s421 = sphi 0, %s421
      %s423 = sphi 0, %s421
      %s424 = sphi 0, %s423
      %s438 = sphi 0, %s424
      %s442 = sphi 0, %s442
      %s444 = sphi 0, %s442
      %s445 = sphi 0, %s444
      %s459 = sphi 0, %s445
      %s467 = sphi 0, %s469
      %s470 = sphi 0, %s467
      %s471 = sphi 0, %s470
      %s487 = sphi 0, %s471
    $region4: #{forward.1} parent=1 // loop_header_branch
      %35 = sbr.rel (%p33) target = $region8
    $region5: #{forward.1} parent=1 // loop_body
      %s37 = ssub.s32 %s32, 1
      %s38 = ssub.s32 %s32, 2
      %s45 = sadd.s32 1, %s40
      %p46 = scmp.ge.s32.totalorder %s45, 2
      %s47 = scalar_select %p46, 0, %s45
      %s48 = sadd.s32 1, %s39
      %s49 = scalar_select %p46, %s48, %s39
      %p50 = scmp.ge.s32.totalorder %s49, 1
      %s51 = scalar_select %p50, 0, %s49
      %s52 = ssub.s32 %s40, %s47
      %p53 = scmp.eq.s32.totalorder %s52, 0
      %s55 = sadd.s32 %s54, 1
      %s56 = scalar_select %p53, %s54, %s55
      %p59 = pneg %p53
      %p60 = scmp.eq.s32.totalorder %s32, 1
      %p61 = por %p59, %p60
      %p62 = scmp.ne.s32.totalorder %s54, %s57
      %p63 = scmp.eq.s32.totalorder %s32, 0
      %p64 = por %p62, %p63
      %p65 = scmp.ne.s32.totalorder %s54, %s57
      %p66 = scmp.eq.s32.totalorder %s37, 1
      %p67 = por %p65, %p66
      %p68 = scmp.ne.s32.totalorder %s57, %s58
      %p69 = scmp.eq.s32.totalorder %s37, 0
      %p70 = por %p68, %p69
      %p71 = scmp.ne.s32.totalorder %s57, %s58
      %p72 = scmp.eq.s32.totalorder %s38, 1
      %p73 = por %p71, %p72
      %p75 = scmp.ne.s32.totalorder %s58, %s74
      %p76 = scmp.eq.s32.totalorder %s38, 0
      %p77 = por %p75, %p76
      %s78 = ssub.s32 %s39, %s51
      %s79 = ssub.s32 %s40, %s47
      %s80 = sor.u32 %s78, %s79
      %p81 = scmp.eq.s32.totalorder %s80, 0
      %s83 = sadd.s32 %s82, 1
      %s84 = scalar_select %p81, %s82, %s83
      %p87 = pneg %p81
      %p88 = scmp.eq.s32.totalorder %s32, 1
      %p89 = por %p87, %p88
      %p90 = scmp.ne.s32.totalorder %s82, %s85
      %p91 = scmp.eq.s32.totalorder %s32, 0
      %p92 = por %p90, %p91
      %p93 = scmp.ne.s32.totalorder %s82, %s85
      %p94 = scmp.eq.s32.totalorder %s37, 1
      %p95 = por %p93, %p94
      %p96 = scmp.ne.s32.totalorder %s85, %s86
      %p97 = scmp.eq.s32.totalorder %s37, 0
      %p98 = por %p96, %p97
      %p99 = scmp.ne.s32.totalorder %s85, %s86
      %p100 = scmp.eq.s32.totalorder %s38, 1
      %p101 = por %p99, %p100
      %p103 = scmp.ne.s32.totalorder %s86, %s102
      %p104 = scmp.eq.s32.totalorder %s38, 0
      %p105 = por %p103, %p104
      %s107 = sadd.s32 %s106, 1
      %p110 = scmp.eq.s32.totalorder %s32, 1
      %p111 = scmp.ne.s32.totalorder %s106, %s108
      %p112 = scmp.eq.s32.totalorder %s32, 0
      %p113 = por %p111, %p112
      %p114 = scmp.ne.s32.totalorder %s106, %s108
      %p115 = scmp.eq.s32.totalorder %s37, 1
      %p116 = por %p114, %p115
      %p117 = scmp.ne.s32.totalorder %s108, %s109
      %p118 = scmp.eq.s32.totalorder %s37, 0
      %p119 = por %p117, %p118
      %p120 = scmp.ne.s32.totalorder %s108, %s109
      %p121 = scmp.eq.s32.totalorder %s38, 1
      %p122 = por %p120, %p121
      %p124 = scmp.ne.s32.totalorder %s109, %s123
      %p125 = scmp.eq.s32.totalorder %s38, 0
      %p126 = por %p124, %p125
      %s128 = sadd.s32 %s127, 1
      %p131 = scmp.eq.s32.totalorder %s32, 1
      %p132 = scmp.ne.s32.totalorder %s127, %s129
      %p133 = scmp.eq.s32.totalorder %s32, 0
      %p134 = por %p132, %p133
      %p135 = scmp.ne.s32.totalorder %s127, %s129
      %p136 = scmp.eq.s32.totalorder %s37, 1
      %p137 = por %p135, %p136
      %p138 = scmp.ne.s32.totalorder %s129, %s130
      %p139 = scmp.eq.s32.totalorder %s37, 0
      %p140 = por %p138, %p139
      %p141 = scmp.ne.s32.totalorder %s129, %s130
      %p142 = scmp.eq.s32.totalorder %s38, 1
      %p143 = por %p141, %p142
      %p145 = scmp.ne.s32.totalorder %s130, %s144
      %p146 = scmp.eq.s32.totalorder %s38, 0
      %p147 = por %p145, %p146
      %s149 = sadd.s32 %s148, 1
      %p152 = scmp.eq.s32.totalorder %s32, 1
      %p153 = scmp.ne.s32.totalorder %s148, %s150
      %p154 = scmp.eq.s32.totalorder %s32, 0
      %p155 = por %p153, %p154
      %p156 = scmp.ne.s32.totalorder %s148, %s150
      %p157 = scmp.eq.s32.totalorder %s37, 1
      %p158 = por %p156, %p157
      %p159 = scmp.ne.s32.totalorder %s150, %s151
      %p160 = scmp.eq.s32.totalorder %s37, 0
      %p161 = por %p159, %p160
      %p162 = scmp.ne.s32.totalorder %s150, %s151
      %p163 = scmp.eq.s32.totalorder %s38, 1
      %p164 = por %p162, %p163
      %p166 = scmp.ne.s32.totalorder %s151, %s165
      %p167 = scmp.eq.s32.totalorder %s38, 0
      %p168 = por %p166, %p167
      %s170 = sadd.s32 %s169, 1
      %p173 = scmp.eq.s32.totalorder %s32, 1
      %p174 = scmp.ne.s32.totalorder %s169, %s171
      %p175 = scmp.eq.s32.totalorder %s32, 0
      %p176 = por %p174, %p175
      %p177 = scmp.ne.s32.totalorder %s169, %s171
      %p178 = scmp.eq.s32.totalorder %s37, 1
      %p179 = por %p177, %p178
      %p180 = scmp.ne.s32.totalorder %s171, %s172
      %p181 = scmp.eq.s32.totalorder %s37, 0
      %p182 = por %p180, %p181
      %p183 = scmp.ne.s32.totalorder %s171, %s172
      %p184 = scmp.eq.s32.totalorder %s38, 1
      %p185 = por %p183, %p184
      %p187 = scmp.ne.s32.totalorder %s172, %s186
      %p188 = scmp.eq.s32.totalorder %s38, 0
      %p189 = por %p187, %p188
      %s191 = sadd.s32 %s190, 1
      %p194 = scmp.eq.s32.totalorder %s32, 1
      %p195 = scmp.ne.s32.totalorder %s190, %s192
      %p196 = scmp.eq.s32.totalorder %s32, 0
      %p197 = por %p195, %p196
      %p198 = scmp.ne.s32.totalorder %s190, %s192
      %p199 = scmp.eq.s32.totalorder %s37, 1
      %p200 = por %p198, %p199
      %p201 = scmp.ne.s32.totalorder %s192, %s193
      %p202 = scmp.eq.s32.totalorder %s37, 0
      %p203 = por %p201, %p202
      %p204 = scmp.ne.s32.totalorder %s192, %s193
      %p205 = scmp.eq.s32.totalorder %s38, 1
      %p206 = por %p204, %p205
      %p208 = scmp.ne.s32.totalorder %s193, %s207
      %p209 = scmp.eq.s32.totalorder %s38, 0
      %p210 = por %p208, %p209
      %s212 = sadd.s32 %s211, 1
      %p215 = scmp.eq.s32.totalorder %s32, 1
      %p216 = scmp.ne.s32.totalorder %s211, %s213
      %p217 = scmp.eq.s32.totalorder %s32, 0
      %p218 = por %p216, %p217
      %p219 = scmp.ne.s32.totalorder %s211, %s213
      %p220 = scmp.eq.s32.totalorder %s37, 1
      %p221 = por %p219, %p220
      %p222 = scmp.ne.s32.totalorder %s213, %s214
      %p223 = scmp.eq.s32.totalorder %s37, 0
      %p224 = por %p222, %p223
      %p225 = scmp.ne.s32.totalorder %s213, %s214
      %p226 = scmp.eq.s32.totalorder %s38, 1
      %p227 = por %p225, %p226
      %p229 = scmp.ne.s32.totalorder %s214, %s228
      %p230 = scmp.eq.s32.totalorder %s38, 0
      %p231 = por %p229, %p230
      %s233 = sadd.s32 %s232, 1
      %p236 = scmp.eq.s32.totalorder %s32, 1
      %p237 = scmp.ne.s32.totalorder %s232, %s234
      %p238 = scmp.eq.s32.totalorder %s32, 0
      %p239 = por %p237, %p238
      %p240 = scmp.ne.s32.totalorder %s232, %s234
      %p241 = scmp.eq.s32.totalorder %s37, 1
      %p242 = por %p240, %p241
      %p243 = scmp.ne.s32.totalorder %s234, %s235
      %p244 = scmp.eq.s32.totalorder %s37, 0
      %p245 = por %p243, %p244
      %p246 = scmp.ne.s32.totalorder %s234, %s235
      %p247 = scmp.eq.s32.totalorder %s38, 1
      %p248 = por %p246, %p247
      %p250 = scmp.ne.s32.totalorder %s235, %s249
      %p251 = scmp.eq.s32.totalorder %s38, 0
      %p252 = por %p250, %p251
      %s254 = sadd.s32 %s253, 1
      %p257 = scmp.eq.s32.totalorder %s32, 1
      %p258 = scmp.ne.s32.totalorder %s253, %s255
      %p259 = scmp.eq.s32.totalorder %s32, 0
      %p260 = por %p258, %p259
      %p261 = scmp.ne.s32.totalorder %s253, %s255
      %p262 = scmp.eq.s32.totalorder %s37, 1
      %p263 = por %p261, %p262
      %p264 = scmp.ne.s32.totalorder %s255, %s256
      %p265 = scmp.eq.s32.totalorder %s37, 0
      %p266 = por %p264, %p265
      %p267 = scmp.ne.s32.totalorder %s255, %s256
      %p268 = scmp.eq.s32.totalorder %s38, 1
      %p269 = por %p267, %p268
      %p271 = scmp.ne.s32.totalorder %s256, %s270
      %p272 = scmp.eq.s32.totalorder %s38, 0
      %p273 = por %p271, %p272
      %s275 = sadd.s32 %s274, 1
      %p278 = scmp.eq.s32.totalorder %s32, 1
      %p279 = scmp.ne.s32.totalorder %s274, %s276
      %p280 = scmp.eq.s32.totalorder %s32, 0
      %p281 = por %p279, %p280
      %p282 = scmp.ne.s32.totalorder %s274, %s276
      %p283 = scmp.eq.s32.totalorder %s37, 1
      %p284 = por %p282, %p283
      %p285 = scmp.ne.s32.totalorder %s276, %s277
      %p286 = scmp.eq.s32.totalorder %s37, 0
      %p287 = por %p285, %p286
      %p288 = scmp.ne.s32.totalorder %s276, %s277
      %p289 = scmp.eq.s32.totalorder %s38, 1
      %p290 = por %p288, %p289
      %p292 = scmp.ne.s32.totalorder %s277, %s291
      %p293 = scmp.eq.s32.totalorder %s38, 0
      %p294 = por %p292, %p293
      %s296 = sadd.s32 %s295, 1
      %p299 = scmp.eq.s32.totalorder %s32, 1
      %p300 = scmp.ne.s32.totalorder %s295, %s297
      %p301 = scmp.eq.s32.totalorder %s32, 0
      %p302 = por %p300, %p301
      %p303 = scmp.ne.s32.totalorder %s295, %s297
      %p304 = scmp.eq.s32.totalorder %s37, 1
      %p305 = por %p303, %p304
      %p306 = scmp.ne.s32.totalorder %s297, %s298
      %p307 = scmp.eq.s32.totalorder %s37, 0
      %p308 = por %p306, %p307
      %p309 = scmp.ne.s32.totalorder %s297, %s298
      %p310 = scmp.eq.s32.totalorder %s38, 1
      %p311 = por %p309, %p310
      %p313 = scmp.ne.s32.totalorder %s298, %s312
      %p314 = scmp.eq.s32.totalorder %s38, 0
      %p315 = por %p313, %p314
      %s317 = sadd.s32 %s316, 1
      %p320 = scmp.eq.s32.totalorder %s32, 1
      %p321 = scmp.ne.s32.totalorder %s316, %s318
      %p322 = scmp.eq.s32.totalorder %s32, 0
      %p323 = por %p321, %p322
      %p324 = scmp.ne.s32.totalorder %s316, %s318
      %p325 = scmp.eq.s32.totalorder %s37, 1
      %p326 = por %p324, %p325
      %p327 = scmp.ne.s32.totalorder %s318, %s319
      %p328 = scmp.eq.s32.totalorder %s37, 0
      %p329 = por %p327, %p328
      %p330 = scmp.ne.s32.totalorder %s318, %s319
      %p331 = scmp.eq.s32.totalorder %s38, 1
      %p332 = por %p330, %p331
      %p334 = scmp.ne.s32.totalorder %s319, %s333
      %p335 = scmp.eq.s32.totalorder %s38, 0
      %p336 = por %p334, %p335
      %s338 = sadd.s32 %s337, 1
      %p341 = scmp.eq.s32.totalorder %s32, 1
      %p342 = scmp.ne.s32.totalorder %s337, %s339
      %p343 = scmp.eq.s32.totalorder %s32, 0
      %p344 = por %p342, %p343
      %p345 = scmp.ne.s32.totalorder %s337, %s339
      %p346 = scmp.eq.s32.totalorder %s37, 1
      %p347 = por %p345, %p346
      %p348 = scmp.ne.s32.totalorder %s339, %s340
      %p349 = scmp.eq.s32.totalorder %s37, 0
      %p350 = por %p348, %p349
      %p351 = scmp.ne.s32.totalorder %s339, %s340
      %p352 = scmp.eq.s32.totalorder %s38, 1
      %p353 = por %p351, %p352
      %p355 = scmp.ne.s32.totalorder %s340, %s354
      %p356 = scmp.eq.s32.totalorder %s38, 0
      %p357 = por %p355, %p356
      %s359 = sadd.s32 %s358, 1
      %p362 = scmp.eq.s32.totalorder %s32, 1
      %p363 = scmp.ne.s32.totalorder %s358, %s360
      %p364 = scmp.eq.s32.totalorder %s32, 0
      %p365 = por %p363, %p364
      %p366 = scmp.ne.s32.totalorder %s358, %s360
      %p367 = scmp.eq.s32.totalorder %s37, 1
      %p368 = por %p366, %p367
      %p369 = scmp.ne.s32.totalorder %s360, %s361
      %p370 = scmp.eq.s32.totalorder %s37, 0
      %p371 = por %p369, %p370
      %p372 = scmp.ne.s32.totalorder %s360, %s361
      %p373 = scmp.eq.s32.totalorder %s38, 1
      %p374 = por %p372, %p373
      %p376 = scmp.ne.s32.totalorder %s361, %s375
      %p377 = scmp.eq.s32.totalorder %s38, 0
      %p378 = por %p376, %p377
      %s380 = sadd.s32 %s379, 1
      %p383 = scmp.eq.s32.totalorder %s32, 1
      %p384 = scmp.ne.s32.totalorder %s379, %s381
      %p385 = scmp.eq.s32.totalorder %s32, 0
      %p386 = por %p384, %p385
      %p387 = scmp.ne.s32.totalorder %s379, %s381
      %p388 = scmp.eq.s32.totalorder %s37, 1
      %p389 = por %p387, %p388
      %p390 = scmp.ne.s32.totalorder %s381, %s382
      %p391 = scmp.eq.s32.totalorder %s37, 0
      %p392 = por %p390, %p391
      %p393 = scmp.ne.s32.totalorder %s381, %s382
      %p394 = scmp.eq.s32.totalorder %s38, 1
      %p395 = por %p393, %p394
      %p397 = scmp.ne.s32.totalorder %s382, %s396
      %p398 = scmp.eq.s32.totalorder %s38, 0
      %p399 = por %p397, %p398
      %s401 = sadd.s32 %s400, 1
      %p404 = scmp.eq.s32.totalorder %s32, 1
      %p405 = scmp.ne.s32.totalorder %s400, %s402
      %p406 = scmp.eq.s32.totalorder %s32, 0
      %p407 = por %p405, %p406
      %p408 = scmp.ne.s32.totalorder %s400, %s402
      %p409 = scmp.eq.s32.totalorder %s37, 1
      %p410 = por %p408, %p409
      %p411 = scmp.ne.s32.totalorder %s402, %s403
      %p412 = scmp.eq.s32.totalorder %s37, 0
      %p413 = por %p411, %p412
      %p414 = scmp.ne.s32.totalorder %s402, %s403
      %p415 = scmp.eq.s32.totalorder %s38, 1
      %p416 = por %p414, %p415
      %p418 = scmp.ne.s32.totalorder %s403, %s417
      %p419 = scmp.eq.s32.totalorder %s38, 0
      %p420 = por %p418, %p419
      %s422 = sadd.s32 %s421, 1
      %p425 = scmp.eq.s32.totalorder %s32, 1
      %p426 = scmp.ne.s32.totalorder %s421, %s423
      %p427 = scmp.eq.s32.totalorder %s32, 0
      %p428 = por %p426, %p427
      %p429 = scmp.ne.s32.totalorder %s421, %s423
      %p430 = scmp.eq.s32.totalorder %s37, 1
      %p431 = por %p429, %p430
      %p432 = scmp.ne.s32.totalorder %s423, %s424
      %p433 = scmp.eq.s32.totalorder %s37, 0
      %p434 = por %p432, %p433
      %p435 = scmp.ne.s32.totalorder %s423, %s424
      %p436 = scmp.eq.s32.totalorder %s38, 1
      %p437 = por %p435, %p436
      %p439 = scmp.ne.s32.totalorder %s424, %s438
      %p440 = scmp.eq.s32.totalorder %s38, 0
      %p441 = por %p439, %p440
      %s443 = sadd.s32 %s442, 1
      %p446 = scmp.eq.s32.totalorder %s32, 1
      %p447 = scmp.ne.s32.totalorder %s442, %s444
      %p448 = scmp.eq.s32.totalorder %s32, 0
      %p449 = por %p447, %p448
      %p450 = scmp.ne.s32.totalorder %s442, %s444
      %p451 = scmp.eq.s32.totalorder %s37, 1
      %p452 = por %p450, %p451
      %p453 = scmp.ne.s32.totalorder %s444, %s445
      %p454 = scmp.eq.s32.totalorder %s37, 0
      %p455 = por %p453, %p454
      %p456 = scmp.ne.s32.totalorder %s444, %s445
      %p457 = scmp.eq.s32.totalorder %s38, 1
      %p458 = por %p456, %p457
      %p460 = scmp.ne.s32.totalorder %s445, %s459
      %p461 = scmp.eq.s32.totalorder %s38, 0
      %p462 = por %p460, %p461
      %s463 = ssub.s32 %s39, %s51
      %s464 = ssub.s32 %s40, %s47
      %s465 = sor.u32 %s463, %s464
      %p466 = scmp.eq.s32.totalorder %s465, 0
      %s468 = sadd.s32 %s467, 1
      %s469 = scalar_select %p466, %s467, %s468
      %p472 = pneg %p466
      %p473 = scmp.eq.s32.totalorder %s32, 1
      %p474 = por %p472, %p473
      %p475 = scmp.ne.s32.totalorder %s467, %s470
      %p476 = scmp.eq.s32.totalorder %s32, 0
      %p477 = por %p475, %p476
      %p478 = scmp.ne.s32.totalorder %s467, %s470
      %p479 = scmp.eq.s32.totalorder %s37, 1
      %p480 = por %p478, %p479
      %p481 = scmp.ne.s32.totalorder %s470, %s471
      %p482 = scmp.eq.s32.totalorder %s37, 0
      %p483 = por %p481, %p482
      %p484 = scmp.ne.s32.totalorder %s470, %s471
      %p485 = scmp.eq.s32.totalorder %s38, 1
      %p486 = por %p484, %p485
      %p488 = scmp.ne.s32.totalorder %s471, %s487
      %p489 = scmp.eq.s32.totalorder %s38, 0
      %p490 = por %p488, %p489
      %p491 = scmp.le.s32.totalorder 1, %s32
      %p492 = scmp.lt.s32.totalorder %s32, 3
      %p493 = pnand %p491, %p492
      %p494 = pneg %p493
      // Predicated region
      $region9: #{forward.1} parent=5 // pred_check
        _
      $region10: #{forward.1} parent=5 // pred_check_branch
        %496 = sbr.rel (%p493) target = $region12
      $region11: #{forward.1} parent=5 // pred_region
        %s497 = ssub.s32 %s32, 1
        // Predicated region
        $region13: #{forward.1} parent=11 // pred_check
          %p498 = pneg %p119
        $region14: #{forward.1} parent=11 // pred_check_branch
          %500 = sbr.rel (%p498) target = $region16
        $region15: #{forward.1} parent=11 // pred_region
          _
        $region16: #{forward.1} parent=11 // pred_fallthru
          _
        // Predicated region
        $region17: #{forward.1} parent=11 // pred_check
          %p501 = pneg %p140
        $region18: #{forward.1} parent=11 // pred_check_branch
          %503 = sbr.rel (%p501) target = $region20
        $region19: #{forward.1} parent=11 // pred_region
          %505 = vsyncadd [#allocation3], 0
          %s506 = sshll.u32 %s3, 4
          %s507 = int_to_ptr.hbm [resolvable:$true] %s506
          %s508 = sshll.u32 [#allocation2], 4
          %s509 = int_to_ptr.vmem [resolvable:$true] %s508
          %514 = dma.hbm_to_vmem [thread:$0]  %s507, 2048, %s509, [#allocation3], 128, 128, 8
        $region20: #{forward.1} parent=11 // pred_fallthru
          _
        // Predicated region
        $region21: #{forward.1} parent=11 // pred_check
          %p515 = pneg %p161
        $region22: #{forward.1} parent=11 // pred_check_branch
          %517 = sbr.rel (%p515) target = $region24
        $region23: #{forward.1} parent=11 // pred_region
          %519 = vsyncadd [#allocation5], 0
          %s521 = sshll.u32 %s4, 4
          %s522 = int_to_ptr.hbm [resolvable:$true] %s521
          %s523 = sshll.u32 [#allocation4], 4
          %s524 = int_to_ptr.vmem [resolvable:$true] %s523
          %526 = dma.hbm_to_vmem [thread:$0]  %s522, 32, %s524, [#allocation5]
        $region24: #{forward.1} parent=11 // pred_fallthru
          _
        // Predicated region
        $region25: #{forward.1} parent=11 // pred_check
          %p527 = pneg %p182
        $region26: #{forward.1} parent=11 // pred_check_branch
          %529 = sbr.rel (%p527) target = $region28
        $region27: #{forward.1} parent=11 // pred_region
          _
        $region28: #{forward.1} parent=11 // pred_fallthru
          _
        // Predicated region
        $region29: #{forward.1} parent=11 // pred_check
          %p530 = pneg %p203
        $region30: #{forward.1} parent=11 // pred_check_branch
          %532 = sbr.rel (%p530) target = $region32
        $region31: #{forward.1} parent=11 // pred_region
          %534 = vsyncadd [#allocation5], 0
          %s536 = sshll.u32 %s6, 4
          %s537 = int_to_ptr.hbm [resolvable:$true] %s536
          %s538 = sshll.u32 [#allocation6], 4
          %s539 = int_to_ptr.vmem [resolvable:$true] %s538
          %541 = dma.hbm_to_vmem [thread:$0]  %s537, 32, %s539, [#allocation5]
        $region32: #{forward.1} parent=11 // pred_fallthru
          _
        // Predicated region
        $region33: #{forward.1} parent=11 // pred_check
          %p542 = pneg %p224
        $region34: #{forward.1} parent=11 // pred_check_branch
          %544 = sbr.rel (%p542) target = $region36
        $region35: #{forward.1} parent=11 // pred_region
          _
        $region36: #{forward.1} parent=11 // pred_fallthru
          _
        // Predicated region
        $region37: #{forward.1} parent=11 // pred_check
          %p545 = pneg %p245
        $region38: #{forward.1} parent=11 // pred_check_branch
          %547 = sbr.rel (%p545) target = $region40
        $region39: #{forward.1} parent=11 // pred_region
          %549 = vsyncadd [#allocation8], 0
          %s551 = sshll.u32 %s8, 4
          %s552 = int_to_ptr.hbm [resolvable:$true] %s551
          %s553 = sshll.u32 [#allocation7], 4
          %s554 = int_to_ptr.vmem [resolvable:$true] %s553
          %556 = dma.hbm_to_vmem [thread:$0]  %s552, 32, %s554, [#allocation8]
        $region40: #{forward.1} parent=11 // pred_fallthru
          _
        // Predicated region
        $region41: #{forward.1} parent=11 // pred_check
          %p557 = pneg %p266
        $region42: #{forward.1} parent=11 // pred_check_branch
          %559 = sbr.rel (%p557) target = $region44
        $region43: #{forward.1} parent=11 // pred_region
          %561 = vsyncadd [#allocation8], 0
          %s562 = sshll.u32 %s9, 4
          %s563 = int_to_ptr.hbm [resolvable:$true] %s562
          %s564 = sshll.u32 [#allocation9], 4
          %s565 = int_to_ptr.vmem [resolvable:$true] %s564
          %570 = dma.hbm_to_vmem [thread:$0]  %s563, 4096, %s565, [#allocation8], 128, 128, 8
        $region44: #{forward.1} parent=11 // pred_fallthru
          _
        // Predicated region
        $region45: #{forward.1} parent=11 // pred_check
          %p571 = pneg %p287
        $region46: #{forward.1} parent=11 // pred_check_branch
          %573 = sbr.rel (%p571) target = $region48
        $region47: #{forward.1} parent=11 // pred_region
          %575 = vsyncadd [#allocation11], 0
          %s577 = sshll.u32 %s10, 4
          %s578 = int_to_ptr.hbm [resolvable:$true] %s577
          %s579 = sshll.u32 [#allocation10], 4
          %s580 = int_to_ptr.vmem [resolvable:$true] %s579
          %582 = dma.hbm_to_vmem [thread:$0]  %s578, 32, %s580, [#allocation11]
        $region48: #{forward.1} parent=11 // pred_fallthru
          _
        // Predicated region
        $region49: #{forward.1} parent=11 // pred_check
          %p583 = pneg %p308
        $region50: #{forward.1} parent=11 // pred_check_branch
          %585 = sbr.rel (%p583) target = $region52
        $region51: #{forward.1} parent=11 // pred_region
          _
        $region52: #{forward.1} parent=11 // pred_fallthru
          _
        // Predicated region
        $region53: #{forward.1} parent=11 // pred_check
          %p586 = pneg %p329
        $region54: #{forward.1} parent=11 // pred_check_branch
          %588 = sbr.rel (%p586) target = $region56
        $region55: #{forward.1} parent=11 // pred_region
          %590 = vsyncadd [#allocation11], 0
          %s592 = sshll.u32 %s12, 4
          %s593 = int_to_ptr.hbm [resolvable:$true] %s592
          %s594 = sshll.u32 [#allocation12], 4
          %s595 = int_to_ptr.vmem [resolvable:$true] %s594
          %597 = dma.hbm_to_vmem [thread:$0]  %s593, 16, %s595, [#allocation11]
        $region56: #{forward.1} parent=11 // pred_fallthru
          _
        // Predicated region
        $region57: #{forward.1} parent=11 // pred_check
          %p598 = pneg %p350
        $region58: #{forward.1} parent=11 // pred_check_branch
          %600 = sbr.rel (%p598) target = $region60
        $region59: #{forward.1} parent=11 // pred_region
          %602 = vsyncadd [#allocation14], 0
          %s604 = sshll.u32 %s13, 4
          %s605 = int_to_ptr.hbm [resolvable:$true] %s604
          %s606 = sshll.u32 [#allocation13], 4
          %s607 = int_to_ptr.vmem [resolvable:$true] %s606
          %609 = dma.hbm_to_vmem [thread:$0]  %s605, 128, %s607, [#allocation14]
        $region60: #{forward.1} parent=11 // pred_fallthru
          _
        // Predicated region
        $region61: #{forward.1} parent=11 // pred_check
          %p610 = pneg %p371
        $region62: #{forward.1} parent=11 // pred_check_branch
          %612 = sbr.rel (%p610) target = $region64
        $region63: #{forward.1} parent=11 // pred_region
          %614 = vsyncadd [#allocation14], 0
          %s616 = sshll.u32 %s14, 4
          %s617 = int_to_ptr.hbm [resolvable:$true] %s616
          %s618 = sshll.u32 [#allocation15], 4
          %s619 = int_to_ptr.vmem [resolvable:$true] %s618
          %621 = dma.hbm_to_vmem [thread:$0]  %s617, 16, %s619, [#allocation14]
        $region64: #{forward.1} parent=11 // pred_fallthru
          _
        // Predicated region
        $region65: #{forward.1} parent=11 // pred_check
          %p622 = pneg %p392
        $region66: #{forward.1} parent=11 // pred_check_branch
          %624 = sbr.rel (%p622) target = $region68
        $region67: #{forward.1} parent=11 // pred_region
          %626 = vsyncadd [#allocation17], 0
          %s627 = sshll.u32 %s15, 4
          %s628 = int_to_ptr.hbm [resolvable:$true] %s627
          %s629 = sshll.u32 [#allocation16], 4
          %s630 = int_to_ptr.vmem [resolvable:$true] %s629
          %635 = dma.hbm_to_vmem [thread:$0]  %s628, 768, %s630, [#allocation17], 64, 64, 4
        $region68: #{forward.1} parent=11 // pred_fallthru
          _
        // Predicated region
        $region69: #{forward.1} parent=11 // pred_check
          %p636 = pneg %p413
        $region70: #{forward.1} parent=11 // pred_check_branch
          %638 = sbr.rel (%p636) target = $region72
        $region71: #{forward.1} parent=11 // pred_region
          %640 = vsyncadd [#allocation17], 0
          %s641 = sshll.u32 %s16, 4
          %s642 = int_to_ptr.hbm [resolvable:$true] %s641
          %s643 = sshll.u32 [#allocation18], 4
          %s644 = int_to_ptr.vmem [resolvable:$true] %s643
          %649 = dma.hbm_to_vmem [thread:$0]  %s642, 48, %s644, [#allocation17], 16, 16, 1
        $region72: #{forward.1} parent=11 // pred_fallthru
          _
        // Predicated region
        $region73: #{forward.1} parent=11 // pred_check
          %p650 = pneg %p434
        $region74: #{forward.1} parent=11 // pred_check_branch
          %652 = sbr.rel (%p650) target = $region76
        $region75: #{forward.1} parent=11 // pred_region
          _
        $region76: #{forward.1} parent=11 // pred_fallthru
          _
        // Predicated region
        $region77: #{forward.1} parent=11 // pred_check
          %p653 = pneg %p455
        $region78: #{forward.1} parent=11 // pred_check_branch
          %655 = sbr.rel (%p653) target = $region80
        $region79: #{forward.1} parent=11 // pred_region
          %657 = vsyncadd [#allocation20], 0
          %s658 = sshll.u32 %s18, 4
          %s659 = int_to_ptr.hbm [resolvable:$true] %s658
          %s660 = sshll.u32 [#allocation19], 4
          %s661 = int_to_ptr.vmem [resolvable:$true] %s660
          %666 = dma.hbm_to_vmem [thread:$0]  %s659, 48, %s661, [#allocation20], 16, 16, 1
        $region80: #{forward.1} parent=11 // pred_fallthru
          _
      $region12: #{forward.1} parent=5 // pred_fallthru
        _
      %p667 = scmp.lt.s32.totalorder %s32, 2
      // Predicated region
      $region81: #{forward.1} parent=5 // pred_check
        %p668 = pneg %p667
      $region82: #{forward.1} parent=5 // pred_check_branch
        %670 = sbr.rel (%p668) target = $region84
      $region83: #{forward.1} parent=5 // pred_region
        // Predicated region
        $region85: #{forward.1} parent=83 // pred_check
          %p671 = pneg %p64
        $region86: #{forward.1} parent=83 // pred_check_branch
          %673 = sbr.rel (%p671) target = $region88
        $region87: #{forward.1} parent=83 // pred_region
          %p674 = scmp.lt.s32.totalorder %s40, 1
          %s675 = scalar_select %p674, %s40, 1
          %s676 = smul.addr %s675, 8
          %s677 = scalar_lea.vmem %s0, %s676
        $region88: #{forward.1} parent=83 // pred_fallthru
          _
        // Predicated region
        $region89: #{forward.1} parent=83 // pred_check
          %p678 = pneg %p92
        $region90: #{forward.1} parent=83 // pred_check_branch
          %680 = sbr.rel (%p678) target = $region92
        $region91: #{forward.1} parent=83 // pred_region
          %p681 = scmp.lt.s32.totalorder %s39, 0
          %s682 = scalar_select %p681, %s39, 0
          %p683 = scmp.lt.s32.totalorder %s40, 1
          %s684 = scalar_select %p683, %s40, 1
          %s685 = smul.addr %s682, 2
          %s686 = sadd.s32 %s684, %s685
          %s687 = smul.addr %s686, 8
          %s688 = scalar_lea.vmem %s1, %s687
        $region92: #{forward.1} parent=83 // pred_fallthru
          _
      $region84: #{forward.1} parent=5 // pred_fallthru
        _
      %p689 = scmp.le.s32.totalorder 1, %s32
      %p690 = scmp.lt.s32.totalorder %s32, 3
      %p691 = pnand %p689, %p690
      %p692 = pneg %p691
      // Predicated region
      $region93: #{forward.1} parent=5 // pred_check
        _
      $region94: #{forward.1} parent=5 // pred_check_branch
        %694 = sbr.rel (%p691) target = $region96
      $region95: #{forward.1} parent=5 // pred_region
        %s695 = ssub.s32 %s32, 1
        // Predicated region
        $region97: #{forward.1} parent=95 // pred_check
          %p696 = pneg %p140
        $region98: #{forward.1} parent=95 // pred_check_branch
          %698 = sbr.rel (%p696) target = $region100
        $region99: #{forward.1} parent=95 // pred_region
          %700 = dma.done [#allocation3], 2048
        $region100: #{forward.1} parent=95 // pred_fallthru
          _
        // Predicated region
        $region101: #{forward.1} parent=95 // pred_check
          %p701 = pneg %p161
        $region102: #{forward.1} parent=95 // pred_check_branch
          %703 = sbr.rel (%p701) target = $region104
        $region103: #{forward.1} parent=95 // pred_region
          %705 = dma.done [#allocation5], 32
        $region104: #{forward.1} parent=95 // pred_fallthru
          _
        // Predicated region
        $region105: #{forward.1} parent=95 // pred_check
          %p706 = pneg %p203
        $region106: #{forward.1} parent=95 // pred_check_branch
          %708 = sbr.rel (%p706) target = $region108
        $region107: #{forward.1} parent=95 // pred_region
          %710 = dma.done [#allocation5], 32
        $region108: #{forward.1} parent=95 // pred_fallthru
          _
        // Predicated region
        $region109: #{forward.1} parent=95 // pred_check
          %p711 = pneg %p245
        $region110: #{forward.1} parent=95 // pred_check_branch
          %713 = sbr.rel (%p711) target = $region112
        $region111: #{forward.1} parent=95 // pred_region
          %715 = dma.done [#allocation8], 32
        $region112: #{forward.1} parent=95 // pred_fallthru
          _
        // Predicated region
        $region113: #{forward.1} parent=95 // pred_check
          %p716 = pneg %p266
        $region114: #{forward.1} parent=95 // pred_check_branch
          %718 = sbr.rel (%p716) target = $region116
        $region115: #{forward.1} parent=95 // pred_region
          %720 = dma.done [#allocation8], 4096
        $region116: #{forward.1} parent=95 // pred_fallthru
          _
        // Predicated region
        $region117: #{forward.1} parent=95 // pred_check
          %p721 = pneg %p287
        $region118: #{forward.1} parent=95 // pred_check_branch
          %723 = sbr.rel (%p721) target = $region120
        $region119: #{forward.1} parent=95 // pred_region
          %725 = dma.done [#allocation11], 32
        $region120: #{forward.1} parent=95 // pred_fallthru
          _
        // Predicated region
        $region121: #{forward.1} parent=95 // pred_check
          %p726 = pneg %p329
        $region122: #{forward.1} parent=95 // pred_check_branch
          %728 = sbr.rel (%p726) target = $region124
        $region123: #{forward.1} parent=95 // pred_region
          %730 = dma.done [#allocation11], 16
        $region124: #{forward.1} parent=95 // pred_fallthru
          _
        // Predicated region
        $region125: #{forward.1} parent=95 // pred_check
          %p731 = pneg %p350
        $region126: #{forward.1} parent=95 // pred_check_branch
          %733 = sbr.rel (%p731) target = $region128
        $region127: #{forward.1} parent=95 // pred_region
          %735 = dma.done [#allocation14], 128
        $region128: #{forward.1} parent=95 // pred_fallthru
          _
        // Predicated region
        $region129: #{forward.1} parent=95 // pred_check
          %p736 = pneg %p371
        $region130: #{forward.1} parent=95 // pred_check_branch
          %738 = sbr.rel (%p736) target = $region132
        $region131: #{forward.1} parent=95 // pred_region
          %740 = dma.done [#allocation14], 16
        $region132: #{forward.1} parent=95 // pred_fallthru
          _
        // Predicated region
        $region133: #{forward.1} parent=95 // pred_check
          %p741 = pneg %p392
        $region134: #{forward.1} parent=95 // pred_check_branch
          %743 = sbr.rel (%p741) target = $region136
        $region135: #{forward.1} parent=95 // pred_region
          %745 = dma.done [#allocation17], 768
        $region136: #{forward.1} parent=95 // pred_fallthru
          _
        // Predicated region
        $region137: #{forward.1} parent=95 // pred_check
          %p746 = pneg %p413
        $region138: #{forward.1} parent=95 // pred_check_branch
          %748 = sbr.rel (%p746) target = $region140
        $region139: #{forward.1} parent=95 // pred_region
          %750 = dma.done [#allocation17], 48
        $region140: #{forward.1} parent=95 // pred_fallthru
          _
        // Predicated region
        $region141: #{forward.1} parent=95 // pred_check
          %p751 = pneg %p455
        $region142: #{forward.1} parent=95 // pred_check_branch
          %753 = sbr.rel (%p751) target = $region144
        $region143: #{forward.1} parent=95 // pred_region
          %755 = dma.done [#allocation20], 48
        $region144: #{forward.1} parent=95 // pred_fallthru
          _
        %p756 = scmp.lt.s32.totalorder %s42, 1
        %s757 = scalar_select %p756, %s42, 1
        %s758 = smul.addr %s757, 8
        %s759 = scalar_lea.vmem %s0, %s758
        %p760 = pneg %p70
        %p761 = pneg %p67
        %p762 = scmp.lt.s32.totalorder %s41, 0
        %s763 = scalar_select %p762, %s41, 0
        %p764 = scmp.lt.s32.totalorder %s42, 1
        %s765 = scalar_select %p764, %s42, 1
        %s766 = smul.addr %s763, 2
        %s767 = sadd.s32 %s765, %s766
        %s768 = smul.addr %s767, 8
        %s769 = scalar_lea.vmem %s1, %s768
        %p770 = pneg %p98
        %p771 = pneg %p95
        %p772 = pneg %p119
        %p773 = pneg %p116
        %p774 = pneg %p140
        %p775 = pneg %p137
        %p776 = pneg %p161
        %p777 = pneg %p158
        %p778 = pneg %p182
        %p779 = pneg %p179
        %p780 = pneg %p203
        %p781 = pneg %p200
        %p782 = pneg %p224
        %p783 = pneg %p221
        %p784 = pneg %p245
        %p785 = pneg %p242
        %p786 = pneg %p266
        %p787 = pneg %p263
        %p788 = pneg %p287
        %p789 = pneg %p284
        %p790 = pneg %p308
        %p791 = pneg %p305
        %p792 = pneg %p329
        %p793 = pneg %p326
        %p794 = pneg %p350
        %p795 = pneg %p347
        %p796 = pneg %p371
        %p797 = pneg %p368
        %p798 = pneg %p392
        %p799 = pneg %p389
        %p800 = pneg %p413
        %p801 = pneg %p410
        %p802 = pneg %p434
        %p803 = pneg %p431
        %p804 = pneg %p455
        %p805 = pneg %p452
        %p806 = pneg %p483
        %p807 = pneg %p480
        %p808 = scmp.lt.s32.totalorder %s41, 0
        %s809 = scalar_select %p808, %s41, 0
        %p810 = scmp.lt.s32.totalorder %s42, 1
        %s811 = scalar_select %p810, %s42, 1
        %s812 = smul.addr %s809, 2
        %s813 = sadd.s32 %s811, %s812
        %s814 = smul.addr %s813, 8
        %s815 = scalar_lea.vmem %s19, %s814
        %p816 = scmp.lt.s32.totalorder %s42, 1
        %s817 = scalar_select %p816, %s42, 1
        %s818 = smul.addr %s817, 8
        %s819 = scalar_lea.vmem %s0, %s818
        %p820 = scmp.lt.s32.totalorder %s41, 0
        %s821 = scalar_select %p820, %s41, 0
        %p822 = scmp.lt.s32.totalorder %s42, 1
        %s823 = scalar_select %p822, %s42, 1
        %s824 = smul.addr %s821, 2
        %s825 = sadd.s32 %s823, %s824
        %s826 = smul.addr %s825, 8
        %s827 = scalar_lea.vmem %s1, %s826
        %p828 = scmp.lt.s32.totalorder %s41, 0
        %s829 = scalar_select %p828, %s41, 0
        %p830 = scmp.lt.s32.totalorder %s42, 1
        %s831 = scalar_select %p830, %s42, 1
        %s832 = smul.addr %s829, 2
        %s833 = sadd.s32 %s831, %s832
        %s834 = smul.addr %s833, 8
        %s835 = scalar_lea.vmem %s19, %s834
        %v837 = vld [vmem:[%s819] sm:$0xff]
        %v838 = vpack.c.bf16 %v837, %v837
        %v839 = vld [vmem:[#allocation2] sm:$0xff]
        %v840 = vld [vmem:[#allocation2 + $0x8] sm:$0xff]
        %v841 = vld [vmem:[#allocation2 + $0x10] sm:$0xff]
        %v842 = vld [vmem:[#allocation2 + $0x18] sm:$0xff]
        %v843 = vld [vmem:[#allocation2 + $0x20] sm:$0xff]
        %v844 = vld [vmem:[#allocation2 + $0x28] sm:$0xff]
        %v845 = vld [vmem:[#allocation2 + $0x30] sm:$0xff]
        %v846 = vld [vmem:[#allocation2 + $0x38] sm:$0xff]
        %v847 = vld [vmem:[#allocation2 + $0x40] sm:$0xff]
        %v848 = vld [vmem:[#allocation2 + $0x48] sm:$0xff]
        %v849 = vld [vmem:[#allocation2 + $0x50] sm:$0xff]
        %v850 = vld [vmem:[#allocation2 + $0x58] sm:$0xff]
        %v851 = vld [vmem:[#allocation2 + $0x60] sm:$0xff]
        %v852 = vld [vmem:[#allocation2 + $0x68] sm:$0xff]
        %v853 = vld [vmem:[#allocation2 + $0x70] sm:$0xff]
        %v854 = vld [vmem:[#allocation2 + $0x78] sm:$0xff]
        %v855 = vld [vmem:[#allocation4] sm:$0x3]
        %v857 = vperm.slane %v855, 0
        %v858 = vperm.slane %v855, 1
        %v877 = vunpack.c.l.b16 %v839
        %v878 = vunpack.c.h.b16 %v839
        %v879 = vunpack.c.l.b16 %v840
        %v880 = vunpack.c.h.b16 %v840
        %v881 = vunpack.c.l.b16 %v841
        %v882 = vunpack.c.h.b16 %v841
        %v883 = vunpack.c.l.b16 %v842
        %v884 = vunpack.c.h.b16 %v842
        %v885 = vunpack.c.l.b16 %v843
        %v886 = vunpack.c.h.b16 %v843
        %v887 = vunpack.c.l.b16 %v844
        %v888 = vunpack.c.h.b16 %v844
        %v889 = vunpack.c.l.b16 %v845
        %v890 = vunpack.c.h.b16 %v845
        %v891 = vunpack.c.l.b16 %v846
        %v892 = vunpack.c.h.b16 %v846
        %v893 = vunpack.c.l.b16 %v847
        %v894 = vunpack.c.h.b16 %v847
        %v895 = vunpack.c.l.b16 %v848
        %v896 = vunpack.c.h.b16 %v848
        %v897 = vunpack.c.l.b16 %v849
        %v898 = vunpack.c.h.b16 %v849
        %v899 = vunpack.c.l.b16 %v850
        %v900 = vunpack.c.h.b16 %v850
        %v901 = vunpack.c.l.b16 %v851
        %v902 = vunpack.c.h.b16 %v851
        %v903 = vunpack.c.l.b16 %v852
        %v904 = vunpack.c.h.b16 %v852
        %v905 = vunpack.c.l.b16 %v853
        %v906 = vunpack.c.h.b16 %v853
        %v907 = vunpack.c.l.b16 %v854
        %v908 = vunpack.c.h.b16 %v854
        %v909 = vpack.c.b16 %v879, %v877
        %v910 = vpack.c.b16 %v880, %v878
        %v911 = vpack.c.b16 %v883, %v881
        %v912 = vpack.c.b16 %v884, %v882
        %v913 = vpack.c.b16 %v887, %v885
        %v914 = vpack.c.b16 %v888, %v886
        %v915 = vpack.c.b16 %v891, %v889
        %v916 = vpack.c.b16 %v892, %v890
        %v917 = vpack.c.b16 %v895, %v893
        %v918 = vpack.c.b16 %v896, %v894
        %v919 = vpack.c.b16 %v899, %v897
        %v920 = vpack.c.b16 %v900, %v898
        %v921 = vpack.c.b16 %v903, %v901
        %v922 = vpack.c.b16 %v904, %v902
        %v923 = vpack.c.b16 %v907, %v905
        %v924 = vpack.c.b16 %v908, %v906
        %941 = vmatpush.bf16.msra.mxu0 %v923
        %942 = vmatpush.bf16.msra.mxu0 %v921
        %943 = vmatpush.bf16.msra.mxu0 %v919
        %944 = vmatpush.bf16.msra.mxu0 %v917
        %945 = vmatpush.bf16.msra.mxu0 %v915
        %946 = vmatpush.bf16.msra.mxu0 %v913
        %947 = vmatpush.bf16.msra.mxu0 %v911
        %948 = vmatpush.bf16.msra.mxu0 %v909
        %949 = vmatmul.bf16.gmra.mxu0 %v838
        %v950 = vpop.f32.mrf.mxu0
        %v951 = vadd.f32 %v857, %v950
        %v952 = vpop.f32.mrf.mxu0
        %953 = vdwg.mxu0
        %954 = vmatpush.bf16.msra.mxu0 %v924
        %955 = vmatpush.bf16.msra.mxu0 %v922
        %956 = vmatpush.bf16.msra.mxu0 %v920
        %957 = vmatpush.bf16.msra.mxu0 %v918
        %958 = vmatpush.bf16.msra.mxu0 %v916
        %959 = vmatpush.bf16.msra.mxu0 %v914
        %960 = vmatpush.bf16.msra.mxu0 %v912
        %961 = vmatpush.bf16.msra.mxu0 %v910
        %962 = vmatmul.bf16.gmra.mxu0 %v838
        %v963 = vpop.f32.mrf.mxu0
        %v964 = vadd.f32 %v858, %v963
        %v965 = vpop.f32.mrf.mxu0
        %966 = vdwg.mxu0
        %v967 = vtanh.pop %v951
        %v968 = vtanh.pop %v964
        %v969 = vpack.c.bf16 %v967, %v967
        %v970 = vpack.c.bf16 %v968, %v968
        %v971 = vld [vmem:[%s5] sm:$0xff]
        %v972 = vld [vmem:[%s5 + $0x8] sm:$0xff]
        %v973 = vld [vmem:[%s5 + $0x10] sm:$0xff]
        %v974 = vld [vmem:[%s5 + $0x18] sm:$0xff]
        %v975 = vld [vmem:[%s5 + $0x20] sm:$0xff]
        %v976 = vld [vmem:[%s5 + $0x28] sm:$0xff]
        %v977 = vld [vmem:[%s5 + $0x30] sm:$0xff]
        %v978 = vld [vmem:[%s5 + $0x38] sm:$0xff]
        %v979 = vld [vmem:[%s5 + $0x40] sm:$0xff]
        %v980 = vld [vmem:[%s5 + $0x48] sm:$0xff]
        %v981 = vld [vmem:[%s5 + $0x50] sm:$0xff]
        %v982 = vld [vmem:[%s5 + $0x58] sm:$0xff]
        %v983 = vld [vmem:[%s5 + $0x60] sm:$0xff]
        %v984 = vld [vmem:[%s5 + $0x68] sm:$0xff]
        %v985 = vld [vmem:[%s5 + $0x70] sm:$0xff]
        %v986 = vld [vmem:[%s5 + $0x78] sm:$0xff]
        %v987 = vld [vmem:[%s5 + $0x80] sm:$0xff]
        %v988 = vld [vmem:[%s5 + $0x88] sm:$0xff]
        %v989 = vld [vmem:[%s5 + $0x90] sm:$0xff]
        %v990 = vld [vmem:[%s5 + $0x98] sm:$0xff]
        %v991 = vld [vmem:[%s5 + $0xa0] sm:$0xff]
        %v992 = vld [vmem:[%s5 + $0xa8] sm:$0xff]
        %v993 = vld [vmem:[%s5 + $0xb0] sm:$0xff]
        %v994 = vld [vmem:[%s5 + $0xb8] sm:$0xff]
        %v995 = vld [vmem:[%s5 + $0xc0] sm:$0xff]
        %v996 = vld [vmem:[%s5 + $0xc8] sm:$0xff]
        %v997 = vld [vmem:[%s5 + $0xd0] sm:$0xff]
        %v998 = vld [vmem:[%s5 + $0xd8] sm:$0xff]
        %v999 = vld [vmem:[%s5 + $0xe0] sm:$0xff]
        %v1000 = vld [vmem:[%s5 + $0xe8] sm:$0xff]
        %v1001 = vld [vmem:[%s5 + $0xf0] sm:$0xff]
        %v1002 = vld [vmem:[%s5 + $0xf8] sm:$0xff]
        %v1003 = vld [vmem:[#allocation6] sm:$0x3]
        %v1005 = vperm.slane %v1003, 0
        %v1006 = vperm.slane %v1003, 1
        %v1041 = vunpack.c.l.b16 %v971
        %v1042 = vunpack.c.h.b16 %v971
        %v1043 = vunpack.c.l.b16 %v972
        %v1044 = vunpack.c.h.b16 %v972
        %v1045 = vunpack.c.l.b16 %v973
        %v1046 = vunpack.c.h.b16 %v973
        %v1047 = vunpack.c.l.b16 %v974
        %v1048 = vunpack.c.h.b16 %v974
        %v1049 = vunpack.c.l.b16 %v975
        %v1050 = vunpack.c.h.b16 %v975
        %v1051 = vunpack.c.l.b16 %v976
        %v1052 = vunpack.c.h.b16 %v976
        %v1053 = vunpack.c.l.b16 %v977
        %v1054 = vunpack.c.h.b16 %v977
        %v1055 = vunpack.c.l.b16 %v978
        %v1056 = vunpack.c.h.b16 %v978
        %v1057 = vunpack.c.l.b16 %v979
        %v1058 = vunpack.c.h.b16 %v979
        %v1059 = vunpack.c.l.b16 %v980
        %v1060 = vunpack.c.h.b16 %v980
        %v1061 = vunpack.c.l.b16 %v981
        %v1062 = vunpack.c.h.b16 %v981
        %v1063 = vunpack.c.l.b16 %v982
        %v1064 = vunpack.c.h.b16 %v982
        %v1065 = vunpack.c.l.b16 %v983
        %v1066 = vunpack.c.h.b16 %v983
        %v1067 = vunpack.c.l.b16 %v984
        %v1068 = vunpack.c.h.b16 %v984
        %v1069 = vunpack.c.l.b16 %v985
        %v1070 = vunpack.c.h.b16 %v985
        %v1071 = vunpack.c.l.b16 %v986
        %v1072 = vunpack.c.h.b16 %v986
        %v1073 = vunpack.c.l.b16 %v987
        %v1074 = vunpack.c.h.b16 %v987
        %v1075 = vunpack.c.l.b16 %v988
        %v1076 = vunpack.c.h.b16 %v988
        %v1077 = vunpack.c.l.b16 %v989
        %v1078 = vunpack.c.h.b16 %v989
        %v1079 = vunpack.c.l.b16 %v990
        %v1080 = vunpack.c.h.b16 %v990
        %v1081 = vunpack.c.l.b16 %v991
        %v1082 = vunpack.c.h.b16 %v991
        %v1083 = vunpack.c.l.b16 %v992
        %v1084 = vunpack.c.h.b16 %v992
        %v1085 = vunpack.c.l.b16 %v993
        %v1086 = vunpack.c.h.b16 %v993
        %v1087 = vunpack.c.l.b16 %v994
        %v1088 = vunpack.c.h.b16 %v994
        %v1089 = vunpack.c.l.b16 %v995
        %v1090 = vunpack.c.h.b16 %v995
        %v1091 = vunpack.c.l.b16 %v996
        %v1092 = vunpack.c.h.b16 %v996
        %v1093 = vunpack.c.l.b16 %v997
        %v1094 = vunpack.c.h.b16 %v997
        %v1095 = vunpack.c.l.b16 %v998
        %v1096 = vunpack.c.h.b16 %v998
        %v1097 = vunpack.c.l.b16 %v999
        %v1098 = vunpack.c.h.b16 %v999
        %v1099 = vunpack.c.l.b16 %v1000
        %v1100 = vunpack.c.h.b16 %v1000
        %v1101 = vunpack.c.l.b16 %v1001
        %v1102 = vunpack.c.h.b16 %v1001
        %v1103 = vunpack.c.l.b16 %v1002
        %v1104 = vunpack.c.h.b16 %v1002
        %v1105 = vpack.c.b16 %v1043, %v1041
        %v1106 = vpack.c.b16 %v1044, %v1042
        %v1107 = vpack.c.b16 %v1047, %v1045
        %v1108 = vpack.c.b16 %v1048, %v1046
        %v1109 = vpack.c.b16 %v1051, %v1049
        %v1110 = vpack.c.b16 %v1052, %v1050
        %v1111 = vpack.c.b16 %v1055, %v1053
        %v1112 = vpack.c.b16 %v1056, %v1054
        %v1113 = vpack.c.b16 %v1059, %v1057
        %v1114 = vpack.c.b16 %v1060, %v1058
        %v1115 = vpack.c.b16 %v1063, %v1061
        %v1116 = vpack.c.b16 %v1064, %v1062
        %v1117 = vpack.c.b16 %v1067, %v1065
        %v1118 = vpack.c.b16 %v1068, %v1066
        %v1119 = vpack.c.b16 %v1071, %v1069
        %v1120 = vpack.c.b16 %v1072, %v1070
        %v1121 = vpack.c.b16 %v1075, %v1073
        %v1122 = vpack.c.b16 %v1076, %v1074
        %v1123 = vpack.c.b16 %v1079, %v1077
        %v1124 = vpack.c.b16 %v1080, %v1078
        %v1125 = vpack.c.b16 %v1083, %v1081
        %v1126 = vpack.c.b16 %v1084, %v1082
        %v1127 = vpack.c.b16 %v1087, %v1085
        %v1128 = vpack.c.b16 %v1088, %v1086
        %v1129 = vpack.c.b16 %v1091, %v1089
        %v1130 = vpack.c.b16 %v1092, %v1090
        %v1131 = vpack.c.b16 %v1095, %v1093
        %v1132 = vpack.c.b16 %v1096, %v1094
        %v1133 = vpack.c.b16 %v1099, %v1097
        %v1134 = vpack.c.b16 %v1100, %v1098
        %v1135 = vpack.c.b16 %v1103, %v1101
        %v1136 = vpack.c.b16 %v1104, %v1102
        %1169 = vmatpush.bf16.msra.mxu0 %v1119
        %1170 = vmatpush.bf16.msra.mxu0 %v1117
        %1171 = vmatpush.bf16.msra.mxu0 %v1115
        %1172 = vmatpush.bf16.msra.mxu0 %v1113
        %1173 = vmatpush.bf16.msra.mxu0 %v1111
        %1174 = vmatpush.bf16.msra.mxu0 %v1109
        %1175 = vmatpush.bf16.msra.mxu0 %v1107
        %1176 = vmatpush.bf16.msra.mxu0 %v1105
        %1177 = vmatmul.bf16.gmra.mxu0 %v969
        %v1178 = vpop.f32.mrf.mxu0
        %v1179 = vadd.f32 %v1005, %v1178
        %v1180 = vpop.f32.mrf.mxu0
        %1181 = vdwg.mxu0
        %1182 = vmatpush.bf16.msra.mxu0 %v1135
        %1183 = vmatpush.bf16.msra.mxu0 %v1133
        %1184 = vmatpush.bf16.msra.mxu0 %v1131
        %1185 = vmatpush.bf16.msra.mxu0 %v1129
        %1186 = vmatpush.bf16.msra.mxu0 %v1127
        %1187 = vmatpush.bf16.msra.mxu0 %v1125
        %1188 = vmatpush.bf16.msra.mxu0 %v1123
        %1189 = vmatpush.bf16.msra.mxu0 %v1121
        %1190 = vmatmul.bf16.gmra.mxu0 %v970
        %v1191 = vpop.f32.mrf.mxu0
        %v1192 = vadd.f32 %v1179, %v1191
        %v1193 = vpop.f32.mrf.mxu0
        %1194 = vdwg.mxu0
        %1195 = vmatpush.bf16.msra.mxu0 %v1120
        %1196 = vmatpush.bf16.msra.mxu0 %v1118
        %1197 = vmatpush.bf16.msra.mxu0 %v1116
        %1198 = vmatpush.bf16.msra.mxu0 %v1114
        %1199 = vmatpush.bf16.msra.mxu0 %v1112
        %1200 = vmatpush.bf16.msra.mxu0 %v1110
        %1201 = vmatpush.bf16.msra.mxu0 %v1108
        %1202 = vmatpush.bf16.msra.mxu0 %v1106
        %1203 = vmatmul.bf16.gmra.mxu0 %v969
        %v1204 = vpop.f32.mrf.mxu0
        %v1205 = vadd.f32 %v1006, %v1204
        %v1206 = vpop.f32.mrf.mxu0
        %1207 = vdwg.mxu0
        %1208 = vmatpush.bf16.msra.mxu0 %v1136
        %1209 = vmatpush.bf16.msra.mxu0 %v1134
        %1210 = vmatpush.bf16.msra.mxu0 %v1132
        %1211 = vmatpush.bf16.msra.mxu0 %v1130
        %1212 = vmatpush.bf16.msra.mxu0 %v1128
        %1213 = vmatpush.bf16.msra.mxu0 %v1126
        %1214 = vmatpush.bf16.msra.mxu0 %v1124
        %1215 = vmatpush.bf16.msra.mxu0 %v1122
        %1216 = vmatmul.bf16.gmra.mxu0 %v970
        %v1217 = vpop.f32.mrf.mxu0
        %v1218 = vadd.f32 %v1205, %v1217
        %v1219 = vpop.f32.mrf.mxu0
        %1220 = vdwg.mxu0
        %v1221 = vtanh.pop %v1192
        %v1222 = vtanh.pop %v1218
        %v1223 = vpack.c.bf16 %v1221, %v1221
        %v1224 = vpack.c.bf16 %v1222, %v1222
        %v1225 = vld [vmem:[%s7] sm:$0xff]
        %v1226 = vld [vmem:[%s7 + $0x8] sm:$0xff]
        %v1227 = vld [vmem:[%s7 + $0x10] sm:$0xff]
        %v1228 = vld [vmem:[%s7 + $0x18] sm:$0xff]
        %v1229 = vld [vmem:[%s7 + $0x20] sm:$0xff]
        %v1230 = vld [vmem:[%s7 + $0x28] sm:$0xff]
        %v1231 = vld [vmem:[%s7 + $0x30] sm:$0xff]
        %v1232 = vld [vmem:[%s7 + $0x38] sm:$0xff]
        %v1233 = vld [vmem:[%s7 + $0x40] sm:$0xff]
        %v1234 = vld [vmem:[%s7 + $0x48] sm:$0xff]
        %v1235 = vld [vmem:[%s7 + $0x50] sm:$0xff]
        %v1236 = vld [vmem:[%s7 + $0x58] sm:$0xff]
        %v1237 = vld [vmem:[%s7 + $0x60] sm:$0xff]
        %v1238 = vld [vmem:[%s7 + $0x68] sm:$0xff]
        %v1239 = vld [vmem:[%s7 + $0x70] sm:$0xff]
        %v1240 = vld [vmem:[%s7 + $0x78] sm:$0xff]
        %v1241 = vld [vmem:[%s7 + $0x80] sm:$0xff]
        %v1242 = vld [vmem:[%s7 + $0x88] sm:$0xff]
        %v1243 = vld [vmem:[%s7 + $0x90] sm:$0xff]
        %v1244 = vld [vmem:[%s7 + $0x98] sm:$0xff]
        %v1245 = vld [vmem:[%s7 + $0xa0] sm:$0xff]
        %v1246 = vld [vmem:[%s7 + $0xa8] sm:$0xff]
        %v1247 = vld [vmem:[%s7 + $0xb0] sm:$0xff]
        %v1248 = vld [vmem:[%s7 + $0xb8] sm:$0xff]
        %v1249 = vld [vmem:[%s7 + $0xc0] sm:$0xff]
        %v1250 = vld [vmem:[%s7 + $0xc8] sm:$0xff]
        %v1251 = vld [vmem:[%s7 + $0xd0] sm:$0xff]
        %v1252 = vld [vmem:[%s7 + $0xd8] sm:$0xff]
        %v1253 = vld [vmem:[%s7 + $0xe0] sm:$0xff]
        %v1254 = vld [vmem:[%s7 + $0xe8] sm:$0xff]
        %v1255 = vld [vmem:[%s7 + $0xf0] sm:$0xff]
        %v1256 = vld [vmem:[%s7 + $0xf8] sm:$0xff]
        %v1257 = vld [vmem:[#allocation7] sm:$0x3]
        %v1259 = vperm.slane %v1257, 0
        %v1260 = vperm.slane %v1257, 1
        %v1295 = vunpack.c.l.b16 %v1225
        %v1296 = vunpack.c.h.b16 %v1225
        %v1297 = vunpack.c.l.b16 %v1226
        %v1298 = vunpack.c.h.b16 %v1226
        %v1299 = vunpack.c.l.b16 %v1227
        %v1300 = vunpack.c.h.b16 %v1227
        %v1301 = vunpack.c.l.b16 %v1228
        %v1302 = vunpack.c.h.b16 %v1228
        %v1303 = vunpack.c.l.b16 %v1229
        %v1304 = vunpack.c.h.b16 %v1229
        %v1305 = vunpack.c.l.b16 %v1230
        %v1306 = vunpack.c.h.b16 %v1230
        %v1307 = vunpack.c.l.b16 %v1231
        %v1308 = vunpack.c.h.b16 %v1231
        %v1309 = vunpack.c.l.b16 %v1232
        %v1310 = vunpack.c.h.b16 %v1232
        %v1311 = vunpack.c.l.b16 %v1233
        %v1312 = vunpack.c.h.b16 %v1233
        %v1313 = vunpack.c.l.b16 %v1234
        %v1314 = vunpack.c.h.b16 %v1234
        %v1315 = vunpack.c.l.b16 %v1235
        %v1316 = vunpack.c.h.b16 %v1235
        %v1317 = vunpack.c.l.b16 %v1236
        %v1318 = vunpack.c.h.b16 %v1236
        %v1319 = vunpack.c.l.b16 %v1237
        %v1320 = vunpack.c.h.b16 %v1237
        %v1321 = vunpack.c.l.b16 %v1238
        %v1322 = vunpack.c.h.b16 %v1238
        %v1323 = vunpack.c.l.b16 %v1239
        %v1324 = vunpack.c.h.b16 %v1239
        %v1325 = vunpack.c.l.b16 %v1240
        %v1326 = vunpack.c.h.b16 %v1240
        %v1327 = vunpack.c.l.b16 %v1241
        %v1328 = vunpack.c.h.b16 %v1241
        %v1329 = vunpack.c.l.b16 %v1242
        %v1330 = vunpack.c.h.b16 %v1242
        %v1331 = vunpack.c.l.b16 %v1243
        %v1332 = vunpack.c.h.b16 %v1243
        %v1333 = vunpack.c.l.b16 %v1244
        %v1334 = vunpack.c.h.b16 %v1244
        %v1335 = vunpack.c.l.b16 %v1245
        %v1336 = vunpack.c.h.b16 %v1245
        %v1337 = vunpack.c.l.b16 %v1246
        %v1338 = vunpack.c.h.b16 %v1246
        %v1339 = vunpack.c.l.b16 %v1247
        %v1340 = vunpack.c.h.b16 %v1247
        %v1341 = vunpack.c.l.b16 %v1248
        %v1342 = vunpack.c.h.b16 %v1248
        %v1343 = vunpack.c.l.b16 %v1249
        %v1344 = vunpack.c.h.b16 %v1249
        %v1345 = vunpack.c.l.b16 %v1250
        %v1346 = vunpack.c.h.b16 %v1250
        %v1347 = vunpack.c.l.b16 %v1251
        %v1348 = vunpack.c.h.b16 %v1251
        %v1349 = vunpack.c.l.b16 %v1252
        %v1350 = vunpack.c.h.b16 %v1252
        %v1351 = vunpack.c.l.b16 %v1253
        %v1352 = vunpack.c.h.b16 %v1253
        %v1353 = vunpack.c.l.b16 %v1254
        %v1354 = vunpack.c.h.b16 %v1254
        %v1355 = vunpack.c.l.b16 %v1255
        %v1356 = vunpack.c.h.b16 %v1255
        %v1357 = vunpack.c.l.b16 %v1256
        %v1358 = vunpack.c.h.b16 %v1256
        %v1359 = vpack.c.b16 %v1297, %v1295
        %v1360 = vpack.c.b16 %v1298, %v1296
        %v1361 = vpack.c.b16 %v1301, %v1299
        %v1362 = vpack.c.b16 %v1302, %v1300
        %v1363 = vpack.c.b16 %v1305, %v1303
        %v1364 = vpack.c.b16 %v1306, %v1304
        %v1365 = vpack.c.b16 %v1309, %v1307
        %v1366 = vpack.c.b16 %v1310, %v1308
        %v1367 = vpack.c.b16 %v1313, %v1311
        %v1368 = vpack.c.b16 %v1314, %v1312
        %v1369 = vpack.c.b16 %v1317, %v1315
        %v1370 = vpack.c.b16 %v1318, %v1316
        %v1371 = vpack.c.b16 %v1321, %v1319
        %v1372 = vpack.c.b16 %v1322, %v1320
        %v1373 = vpack.c.b16 %v1325, %v1323
        %v1374 = vpack.c.b16 %v1326, %v1324
        %v1375 = vpack.c.b16 %v1329, %v1327
        %v1376 = vpack.c.b16 %v1330, %v1328
        %v1377 = vpack.c.b16 %v1333, %v1331
        %v1378 = vpack.c.b16 %v1334, %v1332
        %v1379 = vpack.c.b16 %v1337, %v1335
        %v1380 = vpack.c.b16 %v1338, %v1336
        %v1381 = vpack.c.b16 %v1341, %v1339
        %v1382 = vpack.c.b16 %v1342, %v1340
        %v1383 = vpack.c.b16 %v1345, %v1343
        %v1384 = vpack.c.b16 %v1346, %v1344
        %v1385 = vpack.c.b16 %v1349, %v1347
        %v1386 = vpack.c.b16 %v1350, %v1348
        %v1387 = vpack.c.b16 %v1353, %v1351
        %v1388 = vpack.c.b16 %v1354, %v1352
        %v1389 = vpack.c.b16 %v1357, %v1355
        %v1390 = vpack.c.b16 %v1358, %v1356
        %1423 = vmatpush.bf16.msra.mxu0 %v1373
        %1424 = vmatpush.bf16.msra.mxu0 %v1371
        %1425 = vmatpush.bf16.msra.mxu0 %v1369
        %1426 = vmatpush.bf16.msra.mxu0 %v1367
        %1427 = vmatpush.bf16.msra.mxu0 %v1365
        %1428 = vmatpush.bf16.msra.mxu0 %v1363
        %1429 = vmatpush.bf16.msra.mxu0 %v1361
        %1430 = vmatpush.bf16.msra.mxu0 %v1359
        %1431 = vmatmul.bf16.gmra.mxu0 %v1223
        %v1432 = vpop.f32.mrf.mxu0
        %v1433 = vadd.f32 %v1259, %v1432
        %v1434 = vpop.f32.mrf.mxu0
        %1435 = vdwg.mxu0
        %1436 = vmatpush.bf16.msra.mxu0 %v1389
        %1437 = vmatpush.bf16.msra.mxu0 %v1387
        %1438 = vmatpush.bf16.msra.mxu0 %v1385
        %1439 = vmatpush.bf16.msra.mxu0 %v1383
        %1440 = vmatpush.bf16.msra.mxu0 %v1381
        %1441 = vmatpush.bf16.msra.mxu0 %v1379
        %1442 = vmatpush.bf16.msra.mxu0 %v1377
        %1443 = vmatpush.bf16.msra.mxu0 %v1375
        %1444 = vmatmul.bf16.gmra.mxu0 %v1224
        %v1445 = vpop.f32.mrf.mxu0
        %v1446 = vadd.f32 %v1433, %v1445
        %v1447 = vpop.f32.mrf.mxu0
        %1448 = vdwg.mxu0
        %1449 = vmatpush.bf16.msra.mxu0 %v1374
        %1450 = vmatpush.bf16.msra.mxu0 %v1372
        %1451 = vmatpush.bf16.msra.mxu0 %v1370
        %1452 = vmatpush.bf16.msra.mxu0 %v1368
        %1453 = vmatpush.bf16.msra.mxu0 %v1366
        %1454 = vmatpush.bf16.msra.mxu0 %v1364
        %1455 = vmatpush.bf16.msra.mxu0 %v1362
        %1456 = vmatpush.bf16.msra.mxu0 %v1360
        %1457 = vmatmul.bf16.gmra.mxu0 %v1223
        %v1458 = vpop.f32.mrf.mxu0
        %v1459 = vadd.f32 %v1260, %v1458
        %v1460 = vpop.f32.mrf.mxu0
        %1461 = vdwg.mxu0
        %1462 = vmatpush.bf16.msra.mxu0 %v1390
        %1463 = vmatpush.bf16.msra.mxu0 %v1388
        %1464 = vmatpush.bf16.msra.mxu0 %v1386
        %1465 = vmatpush.bf16.msra.mxu0 %v1384
        %1466 = vmatpush.bf16.msra.mxu0 %v1382
        %1467 = vmatpush.bf16.msra.mxu0 %v1380
        %1468 = vmatpush.bf16.msra.mxu0 %v1378
        %1469 = vmatpush.bf16.msra.mxu0 %v1376
        %1470 = vmatmul.bf16.gmra.mxu0 %v1224
        %v1471 = vpop.f32.mrf.mxu0
        %v1472 = vadd.f32 %v1459, %v1471
        %v1473 = vpop.f32.mrf.mxu0
        %1474 = vdwg.mxu0
        %v1475 = vmax.f32 %v1446, 0.0
        %v1476 = vmax.f32 %v1472, 0.0
        %v1477 = vpack.c.bf16 %v1475, %v1475
        %v1478 = vpack.c.bf16 %v1476, %v1476
        %v1479 = vld [vmem:[#allocation9] sm:$0xff]
        %v1480 = vld [vmem:[#allocation9 + $0x8] sm:$0xff]
        %v1481 = vld [vmem:[#allocation9 + $0x10] sm:$0xff]
        %v1482 = vld [vmem:[#allocation9 + $0x18] sm:$0xff]
        %v1483 = vld [vmem:[#allocation9 + $0x20] sm:$0xff]
        %v1484 = vld [vmem:[#allocation9 + $0x28] sm:$0xff]
        %v1485 = vld [vmem:[#allocation9 + $0x30] sm:$0xff]
        %v1486 = vld [vmem:[#allocation9 + $0x38] sm:$0xff]
        %v1487 = vld [vmem:[#allocation9 + $0x40] sm:$0xff]
        %v1488 = vld [vmem:[#allocation9 + $0x48] sm:$0xff]
        %v1489 = vld [vmem:[#allocation9 + $0x50] sm:$0xff]
        %v1490 = vld [vmem:[#allocation9 + $0x58] sm:$0xff]
        %v1491 = vld [vmem:[#allocation9 + $0x60] sm:$0xff]
        %v1492 = vld [vmem:[#allocation9 + $0x68] sm:$0xff]
        %v1493 = vld [vmem:[#allocation9 + $0x70] sm:$0xff]
        %v1494 = vld [vmem:[#allocation9 + $0x78] sm:$0xff]
        %v1495 = vld [vmem:[#allocation9 + $0x80] sm:$0xff]
        %v1496 = vld [vmem:[#allocation9 + $0x88] sm:$0xff]
        %v1497 = vld [vmem:[#allocation9 + $0x90] sm:$0xff]
        %v1498 = vld [vmem:[#allocation9 + $0x98] sm:$0xff]
        %v1499 = vld [vmem:[#allocation9 + $0xa0] sm:$0xff]
        %v1500 = vld [vmem:[#allocation9 + $0xa8] sm:$0xff]
        %v1501 = vld [vmem:[#allocation9 + $0xb0] sm:$0xff]
        %v1502 = vld [vmem:[#allocation9 + $0xb8] sm:$0xff]
        %v1503 = vld [vmem:[#allocation9 + $0xc0] sm:$0xff]
        %v1504 = vld [vmem:[#allocation9 + $0xc8] sm:$0xff]
        %v1505 = vld [vmem:[#allocation9 + $0xd0] sm:$0xff]
        %v1506 = vld [vmem:[#allocation9 + $0xd8] sm:$0xff]
        %v1507 = vld [vmem:[#allocation9 + $0xe0] sm:$0xff]
        %v1508 = vld [vmem:[#allocation9 + $0xe8] sm:$0xff]
        %v1509 = vld [vmem:[#allocation9 + $0xf0] sm:$0xff]
        %v1510 = vld [vmem:[#allocation9 + $0xf8] sm:$0xff]
        %v1511 = vld [vmem:[#allocation10] sm:$0x3]
        %v1513 = vperm.slane %v1511, 0
        %v1514 = vperm.slane %v1511, 1
        %v1549 = vunpack.c.l.b16 %v1479
        %v1550 = vunpack.c.h.b16 %v1479
        %v1551 = vunpack.c.l.b16 %v1480
        %v1552 = vunpack.c.h.b16 %v1480
        %v1553 = vunpack.c.l.b16 %v1481
        %v1554 = vunpack.c.h.b16 %v1481
        %v1555 = vunpack.c.l.b16 %v1482
        %v1556 = vunpack.c.h.b16 %v1482
        %v1557 = vunpack.c.l.b16 %v1483
        %v1558 = vunpack.c.h.b16 %v1483
        %v1559 = vunpack.c.l.b16 %v1484
        %v1560 = vunpack.c.h.b16 %v1484
        %v1561 = vunpack.c.l.b16 %v1485
        %v1562 = vunpack.c.h.b16 %v1485
        %v1563 = vunpack.c.l.b16 %v1486
        %v1564 = vunpack.c.h.b16 %v1486
        %v1565 = vunpack.c.l.b16 %v1487
        %v1566 = vunpack.c.h.b16 %v1487
        %v1567 = vunpack.c.l.b16 %v1488
        %v1568 = vunpack.c.h.b16 %v1488
        %v1569 = vunpack.c.l.b16 %v1489
        %v1570 = vunpack.c.h.b16 %v1489
        %v1571 = vunpack.c.l.b16 %v1490
        %v1572 = vunpack.c.h.b16 %v1490
        %v1573 = vunpack.c.l.b16 %v1491
        %v1574 = vunpack.c.h.b16 %v1491
        %v1575 = vunpack.c.l.b16 %v1492
        %v1576 = vunpack.c.h.b16 %v1492
        %v1577 = vunpack.c.l.b16 %v1493
        %v1578 = vunpack.c.h.b16 %v1493
        %v1579 = vunpack.c.l.b16 %v1494
        %v1580 = vunpack.c.h.b16 %v1494
        %v1581 = vunpack.c.l.b16 %v1495
        %v1582 = vunpack.c.h.b16 %v1495
        %v1583 = vunpack.c.l.b16 %v1496
        %v1584 = vunpack.c.h.b16 %v1496
        %v1585 = vunpack.c.l.b16 %v1497
        %v1586 = vunpack.c.h.b16 %v1497
        %v1587 = vunpack.c.l.b16 %v1498
        %v1588 = vunpack.c.h.b16 %v1498
        %v1589 = vunpack.c.l.b16 %v1499
        %v1590 = vunpack.c.h.b16 %v1499
        %v1591 = vunpack.c.l.b16 %v1500
        %v1592 = vunpack.c.h.b16 %v1500
        %v1593 = vunpack.c.l.b16 %v1501
        %v1594 = vunpack.c.h.b16 %v1501
        %v1595 = vunpack.c.l.b16 %v1502
        %v1596 = vunpack.c.h.b16 %v1502
        %v1597 = vunpack.c.l.b16 %v1503
        %v1598 = vunpack.c.h.b16 %v1503
        %v1599 = vunpack.c.l.b16 %v1504
        %v1600 = vunpack.c.h.b16 %v1504
        %v1601 = vunpack.c.l.b16 %v1505
        %v1602 = vunpack.c.h.b16 %v1505
        %v1603 = vunpack.c.l.b16 %v1506
        %v1604 = vunpack.c.h.b16 %v1506
        %v1605 = vunpack.c.l.b16 %v1507
        %v1606 = vunpack.c.h.b16 %v1507
        %v1607 = vunpack.c.l.b16 %v1508
        %v1608 = vunpack.c.h.b16 %v1508
        %v1609 = vunpack.c.l.b16 %v1509
        %v1610 = vunpack.c.h.b16 %v1509
        %v1611 = vunpack.c.l.b16 %v1510
        %v1612 = vunpack.c.h.b16 %v1510
        %v1613 = vpack.c.b16 %v1551, %v1549
        %v1614 = vpack.c.b16 %v1552, %v1550
        %v1615 = vpack.c.b16 %v1555, %v1553
        %v1616 = vpack.c.b16 %v1556, %v1554
        %v1617 = vpack.c.b16 %v1559, %v1557
        %v1618 = vpack.c.b16 %v1560, %v1558
        %v1619 = vpack.c.b16 %v1563, %v1561
        %v1620 = vpack.c.b16 %v1564, %v1562
        %v1621 = vpack.c.b16 %v1567, %v1565
        %v1622 = vpack.c.b16 %v1568, %v1566
        %v1623 = vpack.c.b16 %v1571, %v1569
        %v1624 = vpack.c.b16 %v1572, %v1570
        %v1625 = vpack.c.b16 %v1575, %v1573
        %v1626 = vpack.c.b16 %v1576, %v1574
        %v1627 = vpack.c.b16 %v1579, %v1577
        %v1628 = vpack.c.b16 %v1580, %v1578
        %v1629 = vpack.c.b16 %v1583, %v1581
        %v1630 = vpack.c.b16 %v1584, %v1582
        %v1631 = vpack.c.b16 %v1587, %v1585
        %v1632 = vpack.c.b16 %v1588, %v1586
        %v1633 = vpack.c.b16 %v1591, %v1589
        %v1634 = vpack.c.b16 %v1592, %v1590
        %v1635 = vpack.c.b16 %v1595, %v1593
        %v1636 = vpack.c.b16 %v1596, %v1594
        %v1637 = vpack.c.b16 %v1599, %v1597
        %v1638 = vpack.c.b16 %v1600, %v1598
        %v1639 = vpack.c.b16 %v1603, %v1601
        %v1640 = vpack.c.b16 %v1604, %v1602
        %v1641 = vpack.c.b16 %v1607, %v1605
        %v1642 = vpack.c.b16 %v1608, %v1606
        %v1643 = vpack.c.b16 %v1611, %v1609
        %v1644 = vpack.c.b16 %v1612, %v1610
        %1677 = vmatpush.bf16.msra.mxu0 %v1627
        %1678 = vmatpush.bf16.msra.mxu0 %v1625
        %1679 = vmatpush.bf16.msra.mxu0 %v1623
        %1680 = vmatpush.bf16.msra.mxu0 %v1621
        %1681 = vmatpush.bf16.msra.mxu0 %v1619
        %1682 = vmatpush.bf16.msra.mxu0 %v1617
        %1683 = vmatpush.bf16.msra.mxu0 %v1615
        %1684 = vmatpush.bf16.msra.mxu0 %v1613
        %1685 = vmatmul.bf16.gmra.mxu0 %v1477
        %v1686 = vpop.f32.mrf.mxu0
        %v1687 = vadd.f32 %v1513, %v1686
        %v1688 = vpop.f32.mrf.mxu0
        %1689 = vdwg.mxu0
        %1690 = vmatpush.bf16.msra.mxu0 %v1643
        %1691 = vmatpush.bf16.msra.mxu0 %v1641
        %1692 = vmatpush.bf16.msra.mxu0 %v1639
        %1693 = vmatpush.bf16.msra.mxu0 %v1637
        %1694 = vmatpush.bf16.msra.mxu0 %v1635
        %1695 = vmatpush.bf16.msra.mxu0 %v1633
        %1696 = vmatpush.bf16.msra.mxu0 %v1631
        %1697 = vmatpush.bf16.msra.mxu0 %v1629
        %1698 = vmatmul.bf16.gmra.mxu0 %v1478
        %v1699 = vpop.f32.mrf.mxu0
        %v1700 = vadd.f32 %v1687, %v1699
        %v1701 = vpop.f32.mrf.mxu0
        %1702 = vdwg.mxu0
        %1703 = vmatpush.bf16.msra.mxu0 %v1628
        %1704 = vmatpush.bf16.msra.mxu0 %v1626
        %1705 = vmatpush.bf16.msra.mxu0 %v1624
        %1706 = vmatpush.bf16.msra.mxu0 %v1622
        %1707 = vmatpush.bf16.msra.mxu0 %v1620
        %1708 = vmatpush.bf16.msra.mxu0 %v1618
        %1709 = vmatpush.bf16.msra.mxu0 %v1616
        %1710 = vmatpush.bf16.msra.mxu0 %v1614
        %1711 = vmatmul.bf16.gmra.mxu0 %v1477
        %v1712 = vpop.f32.mrf.mxu0
        %v1713 = vadd.f32 %v1514, %v1712
        %v1714 = vpop.f32.mrf.mxu0
        %1715 = vdwg.mxu0
        %1716 = vmatpush.bf16.msra.mxu0 %v1644
        %1717 = vmatpush.bf16.msra.mxu0 %v1642
        %1718 = vmatpush.bf16.msra.mxu0 %v1640
        %1719 = vmatpush.bf16.msra.mxu0 %v1638
        %1720 = vmatpush.bf16.msra.mxu0 %v1636
        %1721 = vmatpush.bf16.msra.mxu0 %v1634
        %1722 = vmatpush.bf16.msra.mxu0 %v1632
        %1723 = vmatpush.bf16.msra.mxu0 %v1630
        %1724 = vmatmul.bf16.gmra.mxu0 %v1478
        %v1725 = vpop.f32.mrf.mxu0
        %v1726 = vadd.f32 %v1713, %v1725
        %v1727 = vpop.f32.mrf.mxu0
        %1728 = vdwg.mxu0
        %v1729 = vmax.f32 %v1700, 0.0
        %v1730 = vmax.f32 %v1726, 0.0
        %v1731 = vpack.c.bf16 %v1729, %v1729
        %v1732 = vpack.c.bf16 %v1730, %v1730
        %v1733 = vld [vmem:[%s11] sm:$0xf]
        %v1734 = vld [vmem:[%s11 + $0x4] sm:$0xf]
        %v1735 = vld [vmem:[%s11 + $0x8] sm:$0xf]
        %v1736 = vld [vmem:[%s11 + $0xc] sm:$0xf]
        %v1737 = vld [vmem:[%s11 + $0x10] sm:$0xf]
        %v1738 = vld [vmem:[%s11 + $0x14] sm:$0xf]
        %v1739 = vld [vmem:[%s11 + $0x18] sm:$0xf]
        %v1740 = vld [vmem:[%s11 + $0x1c] sm:$0xf]
        %v1741 = vld [vmem:[%s11 + $0x20] sm:$0xf]
        %v1742 = vld [vmem:[%s11 + $0x24] sm:$0xf]
        %v1743 = vld [vmem:[%s11 + $0x28] sm:$0xf]
        %v1744 = vld [vmem:[%s11 + $0x2c] sm:$0xf]
        %v1745 = vld [vmem:[%s11 + $0x30] sm:$0xf]
        %v1746 = vld [vmem:[%s11 + $0x34] sm:$0xf]
        %v1747 = vld [vmem:[%s11 + $0x38] sm:$0xf]
        %v1748 = vld [vmem:[%s11 + $0x3c] sm:$0xf]
        %v1749 = vld [vmem:[%s11 + $0x40] sm:$0xf]
        %v1750 = vld [vmem:[%s11 + $0x44] sm:$0xf]
        %v1751 = vld [vmem:[%s11 + $0x48] sm:$0xf]
        %v1752 = vld [vmem:[%s11 + $0x4c] sm:$0xf]
        %v1753 = vld [vmem:[%s11 + $0x50] sm:$0xf]
        %v1754 = vld [vmem:[%s11 + $0x54] sm:$0xf]
        %v1755 = vld [vmem:[%s11 + $0x58] sm:$0xf]
        %v1756 = vld [vmem:[%s11 + $0x5c] sm:$0xf]
        %v1757 = vld [vmem:[%s11 + $0x60] sm:$0xf]
        %v1758 = vld [vmem:[%s11 + $0x64] sm:$0xf]
        %v1759 = vld [vmem:[%s11 + $0x68] sm:$0xf]
        %v1760 = vld [vmem:[%s11 + $0x6c] sm:$0xf]
        %v1761 = vld [vmem:[%s11 + $0x70] sm:$0xf]
        %v1762 = vld [vmem:[%s11 + $0x74] sm:$0xf]
        %v1763 = vld [vmem:[%s11 + $0x78] sm:$0xf]
        %v1764 = vld [vmem:[%s11 + $0x7c] sm:$0xf]
        %v1765 = vld [vmem:[#allocation12] sm:$0x1]
        %v1767 = vperm.slane %v1765, 0
        %v1801 = vunpack.c.l.b16 %v1733
        %v1802 = vunpack.c.l.b16 %v1734
        %v1803 = vunpack.c.l.b16 %v1735
        %v1804 = vunpack.c.l.b16 %v1736
        %v1805 = vunpack.c.l.b16 %v1737
        %v1806 = vunpack.c.l.b16 %v1738
        %v1807 = vunpack.c.l.b16 %v1739
        %v1808 = vunpack.c.l.b16 %v1740
        %v1809 = vunpack.c.l.b16 %v1741
        %v1810 = vunpack.c.l.b16 %v1742
        %v1811 = vunpack.c.l.b16 %v1743
        %v1812 = vunpack.c.l.b16 %v1744
        %v1813 = vunpack.c.l.b16 %v1745
        %v1814 = vunpack.c.l.b16 %v1746
        %v1815 = vunpack.c.l.b16 %v1747
        %v1816 = vunpack.c.l.b16 %v1748
        %v1817 = vunpack.c.l.b16 %v1749
        %v1818 = vunpack.c.l.b16 %v1750
        %v1819 = vunpack.c.l.b16 %v1751
        %v1820 = vunpack.c.l.b16 %v1752
        %v1821 = vunpack.c.l.b16 %v1753
        %v1822 = vunpack.c.l.b16 %v1754
        %v1823 = vunpack.c.l.b16 %v1755
        %v1824 = vunpack.c.l.b16 %v1756
        %v1825 = vunpack.c.l.b16 %v1757
        %v1826 = vunpack.c.l.b16 %v1758
        %v1827 = vunpack.c.l.b16 %v1759
        %v1828 = vunpack.c.l.b16 %v1760
        %v1829 = vunpack.c.l.b16 %v1761
        %v1830 = vunpack.c.l.b16 %v1762
        %v1831 = vunpack.c.l.b16 %v1763
        %v1832 = vunpack.c.l.b16 %v1764
        %v1833 = vpack.c.b16 %v1802, %v1801
        %v1834 = vpack.c.b16 %v1804, %v1803
        %v1835 = vpack.c.b16 %v1806, %v1805
        %v1836 = vpack.c.b16 %v1808, %v1807
        %v1837 = vpack.c.b16 %v1810, %v1809
        %v1838 = vpack.c.b16 %v1812, %v1811
        %v1839 = vpack.c.b16 %v1814, %v1813
        %v1840 = vpack.c.b16 %v1816, %v1815
        %v1841 = vpack.c.b16 %v1818, %v1817
        %v1842 = vpack.c.b16 %v1820, %v1819
        %v1843 = vpack.c.b16 %v1822, %v1821
        %v1844 = vpack.c.b16 %v1824, %v1823
        %v1845 = vpack.c.b16 %v1826, %v1825
        %v1846 = vpack.c.b16 %v1828, %v1827
        %v1847 = vpack.c.b16 %v1830, %v1829
        %v1848 = vpack.c.b16 %v1832, %v1831
        %1865 = vmatpush.bf16.msra.mxu0 %v1840
        %1866 = vmatpush.bf16.msra.mxu0 %v1839
        %1867 = vmatpush.bf16.msra.mxu0 %v1838
        %1868 = vmatpush.bf16.msra.mxu0 %v1837
        %1869 = vmatpush.bf16.msra.mxu0 %v1836
        %1870 = vmatpush.bf16.msra.mxu0 %v1835
        %1871 = vmatpush.bf16.msra.mxu0 %v1834
        %1872 = vmatpush.bf16.msra.mxu0 %v1833
        %1873 = vmatmul.bf16.gmra.mxu0 %v1731
        %v1874 = vpop.f32.mrf.mxu0
        %v1875 = vadd.f32 %v1767, %v1874
        %v1876 = vpop.f32.mrf.mxu0
        %1877 = vdwg.mxu0
        %1878 = vmatpush.bf16.msra.mxu0 %v1848
        %1879 = vmatpush.bf16.msra.mxu0 %v1847
        %1880 = vmatpush.bf16.msra.mxu0 %v1846
        %1881 = vmatpush.bf16.msra.mxu0 %v1845
        %1882 = vmatpush.bf16.msra.mxu0 %v1844
        %1883 = vmatpush.bf16.msra.mxu0 %v1843
        %1884 = vmatpush.bf16.msra.mxu0 %v1842
        %1885 = vmatpush.bf16.msra.mxu0 %v1841
        %1886 = vmatmul.bf16.gmra.mxu0 %v1732
        %v1887 = vpop.f32.mrf.mxu0
        %v1888 = vadd.f32 %v1875, %v1887
        %v1889 = vpop.f32.mrf.mxu0
        %1890 = vdwg.mxu0
        %vm1891 = vcmp.gt.f32.partialorder %v1888, 20.0
        %v1892 = vand.u32 2147483647, %v1888
        %v1893 = vsub.f32 0.0, %v1892
        %v1894 = vmul.f32 %v1893, 1.442695
        %v1895 = vpow.pop %v1894
        %v1896 = vadd.f32 %v1895, 1.0
        %v1897 = vlog2.pop %v1896
        %v1898 = vmul.f32 %v1897, 0.6931472
        %v1899 = vmul.f32 -0.5, %v1895
        %v1900 = vadd.f32 %v1899, 1.0
        %v1901 = vmul.f32 %v1900, %v1895
        %v1902 = vand.u32 2147483647, %v1895
        %vm1903 = vcmp.lt.f32.partialorder %v1902, 0.0004427343
        %v1904 = vsel %vm1903, %v1901, %v1898
        %v1905 = vmax.f32 %v1888, 0.0
        %v1906 = vadd.f32 %v1904, %v1905
        %v1907 = vsel %vm1891, %v1888, %v1906
        %v1908 = vadd.f32 %v1907, 0.0001
        %v1909 = vld [vmem:[%s827] sm:$0xff]
        %1911 = vrot.lane.b32.xlu0 %v1909, 6
        %v1912 = vpop.permute.xlu0 %1911
        %v1914 = vmul.f32 %v1908, %v1912
        %1916 = vrot.lane.b32.xlu0 %v1914, 122
        %v1917 = vpop.permute.xlu0 %1916
        %v1919 = vadd.f32 %v1888, %v1917
        %v1920 = vld [vmem:[#allocation13] sm:$0x3f]
        %v1921 = vld [vmem:[#allocation15] sm:$0x1]
        %v1923 = vperm.slane %v1921, 0
        %vm1925 = vcmask 48128
        %v1927 = vsel %vm1925, %v1919, 0
        %vm1929 = vcmask 1045504
        %v1931 = vsel %vm1929, %v1920, 0
        %1933 = vmatpush.msra.mxu0 0.0
        %1934 = vmatpush.msra.mxu0 0.0
        %1935 = vmatpush.msra.mxu0 0.0
        %1936 = vmatpush.msra.mxu0 0.0
        %1937 = vmatpush.msra.mxu0 0.0
        %1938 = vmatpush.msra.mxu0 0.0
        %1939 = vmatpush.msra.mxu0 0.0
        %1940 = vmatpush.msra.mxu0 0.0
        %1941 = vmatpush.msra.mxu0 0.0
        %1942 = vmatpush.msra.mxu0 0.0
        %1943 = vmatpush.msra.mxu0 0.0
        %1944 = vmatpush.msra.mxu0 0.0
        %1945 = vmatpush.msra.mxu0 0.0
        %1946 = vmatpush.msra.mxu0 0.0
        %1947 = vmatpush.msra.mxu0 0.0
        %1948 = vmatpush.msra.mxu0 %v1931
        %1949 = vmatmul.f32.gmra.mxu0 %v1927
        %v1950 = vpop.f32.mrf.mxu0
        %v1951 = vadd.f32 %v1923, %v1950
        %1952 = vdwg.mxu0
        %v1953 = vtanh.pop %v1951
        %vm1954 = vcmp.gt.f32.partialorder %v1951, 20.0
        %v1955 = vand.u32 2147483647, %v1951
        %v1956 = vsub.f32 0.0, %v1955
        %v1957 = vmul.f32 %v1956, 1.442695
        %v1958 = vpow.pop %v1957
        %v1959 = vadd.f32 %v1958, 1.0
        %v1960 = vlog2.pop %v1959
        %v1961 = vmul.f32 %v1960, 0.6931472
        %v1962 = vmul.f32 -0.5, %v1958
        %v1963 = vadd.f32 %v1962, 1.0
        %v1964 = vmul.f32 %v1963, %v1958
        %v1965 = vand.u32 2147483647, %v1958
        %vm1966 = vcmp.lt.f32.partialorder %v1965, 0.0004427343
        %v1967 = vsel %vm1966, %v1964, %v1961
        %v1968 = vmax.f32 %v1951, 0.0
        %v1969 = vadd.f32 %v1967, %v1968
        %v1970 = vsel %vm1954, %v1951, %v1969
        %v1971 = vadd.f32 %v1970, 0.0001
        %1973 = vrot.lane.b32.xlu0 %v1953, 123
        %v1974 = vpop.permute.xlu0 %1973
        %v1976 = vsub.f32 %v837, %v1974
        %1978 = vrot.lane.b32.xlu0 %v1971, 103
        %v1979 = vpop.permute.xlu0 %1978
        %v1981 = vrcp.pop %v1979
        %v1982 = vmul.f32 %v1979, %v1981
        %v1983 = vsub.f32 1.0, %v1982
        %v1984 = vmul.f32 %v1981, %v1983
        %v1985 = vadd.f32 %v1981, %v1984
        %vm1986 = vweird.f32 %v1979
        %vm1987 = vweird.f32 %v1981
        %vm1988 = vmor %vm1986, %vm1987
        %v1989 = vsel %vm1988, %v1981, %v1985
        %v1990 = vand.u32 2147483647, %v1979
        %vm1991 = vcmp.eq.f32.partialorder %v1990, 8.507059e+37
        %v1992 = vand.u32 %v1979, 2147483648
        %v1993 = vor.u32 1.1754944e-38, %v1992
        %v1994 = vsel %vm1991, %v1993, %v1989
        %v1995 = vmul.f32 %v1976, %v1994
        %v1996 = vmul.f32 %v1995, -0.5
        %v1997 = vmul.f32 %v1996, %v1995
        %v1998 = vlog2.pop %v1971
        %v1999 = vmul.f32 %v1998, 0.6931472
        %2001 = vrot.lane.b32.xlu0 %v1999, 103
        %v2002 = vpop.permute.xlu0 %2001
        %v2004 = vsub.f32 %v1997, %v2002
        %v2005 = vsub.f32 %v2004, 0.9189385
        %v2006 = vld [vmem:[%s2] sm:$0xff]
        %v2007 = vld [vmem:[%s2 + $0x8] sm:$0xff]
        %v2008 = vld [vmem:[%s2 + $0x10] sm:$0xf]
        %vm2009 = vcmask 162816
        %v2011 = vsel %vm2009, %v2005, 0
        %vm2013 = vcmask 1043456
        %v2015 = vsel %vm2013, %v2008, 0
        %2017 = vmatpush.msra.mxu0 0.0
        %2018 = vmatpush.msra.mxu0 0.0
        %2019 = vmatpush.msra.mxu0 0.0
        %2020 = vmatpush.msra.mxu0 0.0
        %2021 = vmatpush.msra.mxu0 0.0
        %2022 = vmatpush.msra.mxu0 0.0
        %2023 = vmatpush.msra.mxu0 0.0
        %2024 = vmatpush.msra.mxu0 0.0
        %2025 = vmatpush.msra.mxu0 0.0
        %2026 = vmatpush.msra.mxu0 0.0
        %2027 = vmatpush.msra.mxu0 0.0
        %2028 = vmatpush.msra.mxu0 0.0
        %2029 = vmatpush.msra.mxu0 0.0
        %2030 = vmatpush.msra.mxu0 %v2015
        %2031 = vmatpush.msra.mxu0 %v2007
        %2032 = vmatpush.msra.mxu0 %v2006
        %2033 = vmatmul.f32.gmra.mxu0 %v2011
        %v2034 = vpop.f32.mrf.mxu0
        %v2035 = vadd.f32 0.0, %v2034
        %2036 = vdwg.mxu0
        %v2037 = vadd.f32 %v1951, %v2035
        %vm2038 = vcmask 39936
        %v2039 = vsel %vm2038, %v2037, -inf
        %2040 = vmax.xlane.f32.xlu0 %v2039
        %v2041 = vpop.xlane.xlu0 %2040
        %v2042 = vsub.f32 %v2037, %v2041
        %v2043 = vmul.f32 %v2042, 1.442695
        %v2044 = vpow.pop %v2043
        %v2045 = vsel %vm2038, %v2044, 0.0
        %2046 = vadd.xlane.f32.xlu0 %v2045
        %v2047 = vpop.xlane.xlu0 %2046
        %v2048 = vlog2.pop %v2047
        %v2049 = vmul.f32 %v2048, 0.6931472
        %v2050 = vadd.f32 %v2041, %v2049
        %v2051 = vsub.f32 %v2037, %v2050
        %v2052 = vmul.f32 %v2051, 1.442695
        %v2053 = vpow.pop %v2052
        %v2054 = vpack.c.bf16 %v1951, %v1951
        %v2055 = vld [vmem:[#allocation16] sm:$0xf]
        %v2056 = vld [vmem:[#allocation16 + $0x4] sm:$0xf]
        %v2057 = vld [vmem:[#allocation16 + $0x8] sm:$0xf]
        %v2058 = vld [vmem:[#allocation16 + $0xc] sm:$0x3]
        %v2059 = vld [vmem:[#allocation18] sm:$0x1]
        %v2061 = vperm.slane %v2059, 0
        %2064 = vrot.lane.b32.xlu0 %v2054, 83
        %v2065 = vpop.permute.xlu0 %2064
        %v2070 = vunpack.c.l.b16 %v2055
        %v2071 = vunpack.c.l.b16 %v2056
        %v2072 = vunpack.c.l.b16 %v2057
        %v2073 = vunpack.c.l.b16 %v2058
        %v2074 = vpack.c.b16 %v2071, %v2070
        %v2075 = vpack.c.b16 %v2073, %v2072
        %vm2077 = vcmask 228352
        %v2079 = vsel %vm2077, %v2065, 0
        %v2082 = vsel %vm1929, %v2075, 0
        %2084 = vmatpush.bf16.msra.mxu0 0
        %2085 = vmatpush.bf16.msra.mxu0 0
        %2086 = vmatpush.bf16.msra.mxu0 0
        %2087 = vmatpush.bf16.msra.mxu0 0
        %2088 = vmatpush.bf16.msra.mxu0 0
        %2089 = vmatpush.bf16.msra.mxu0 0
        %2090 = vmatpush.bf16.msra.mxu0 %v2082
        %2091 = vmatpush.bf16.msra.mxu0 %v2074
        %2092 = vmatmul.bf16.gmra.mxu0 %v2079
        %v2093 = vpop.f32.mrf.mxu0
        %v2094 = vadd.f32 %v2061, %v2093
        %v2095 = vpop.f32.mrf.mxu0
        %2096 = vdwg.mxu0
        %v2097 = vmax.f32 %v2094, 0.0
        %v2098 = vpack.c.bf16 %v2097, %v2097
        %v2099 = vld [vmem:[%s17] sm:$0xf]
        %v2100 = vld [vmem:[%s17 + $0x4] sm:$0xf]
        %v2101 = vld [vmem:[%s17 + $0x8] sm:$0xf]
        %v2102 = vld [vmem:[%s17 + $0xc] sm:$0xf]
        %v2103 = vld [vmem:[%s17 + $0x10] sm:$0xf]
        %v2104 = vld [vmem:[%s17 + $0x14] sm:$0xf]
        %v2105 = vld [vmem:[%s17 + $0x18] sm:$0xf]
        %v2106 = vld [vmem:[%s17 + $0x1c] sm:$0xf]
        %v2107 = vld [vmem:[#allocation19] sm:$0x1]
        %v2109 = vperm.slane %v2107, 0
        %v2119 = vunpack.c.l.b16 %v2099
        %v2120 = vunpack.c.l.b16 %v2100
        %v2121 = vunpack.c.l.b16 %v2101
        %v2122 = vunpack.c.l.b16 %v2102
        %v2123 = vunpack.c.l.b16 %v2103
        %v2124 = vunpack.c.l.b16 %v2104
        %v2125 = vunpack.c.l.b16 %v2105
        %v2126 = vunpack.c.l.b16 %v2106
        %v2127 = vpack.c.b16 %v2120, %v2119
        %v2128 = vpack.c.b16 %v2122, %v2121
        %v2129 = vpack.c.b16 %v2124, %v2123
        %v2130 = vpack.c.b16 %v2126, %v2125
        %vm2135 = vcmask 523264
        %v2137 = vsel %vm2135, %v2098, 0
        %2139 = vmatpush.bf16.msra.mxu0 0
        %2140 = vmatpush.bf16.msra.mxu0 0
        %2141 = vmatpush.bf16.msra.mxu0 0
        %2142 = vmatpush.bf16.msra.mxu0 0
        %2143 = vmatpush.bf16.msra.mxu0 %v2130
        %2144 = vmatpush.bf16.msra.mxu0 %v2129
        %2145 = vmatpush.bf16.msra.mxu0 %v2128
        %2146 = vmatpush.bf16.msra.mxu0 %v2127
        %2147 = vmatmul.bf16.gmra.mxu0 %v2137
        %v2148 = vpop.f32.mrf.mxu0
        %v2149 = vadd.f32 %v2109, %v2148
        %v2150 = vpop.f32.mrf.mxu0
        %2151 = vdwg.mxu0
        %2153 = vrot.lane.b32.xlu0 %v2149, 45
        %v2154 = vpop.permute.xlu0 %2153
        %v2156 = vadd.f32 %v1951, %v2154
        %v2157 = vpack.c.bf16 %v2156, %v2156
        %s2158 = scalar_lea.vmem [#allocation16], 16
        %v2159 = vld [vmem:[%s2158] sm:$0xf]
        %v2160 = vld [vmem:[%s2158 + $0x4] sm:$0xf]
        %v2161 = vld [vmem:[%s2158 + $0x8] sm:$0xf]
        %v2162 = vld [vmem:[%s2158 + $0xc] sm:$0x3]
        %s2163 = scalar_lea.vmem [#allocation18], 1
        %v2164 = vld [vmem:[%s2163] sm:$0x1]
        %v2166 = vperm.slane %v2164, 0
        %2169 = vrot.lane.b32.xlu0 %v2157, 83
        %v2170 = vpop.permute.xlu0 %2169
        %v2175 = vunpack.c.l.b16 %v2159
        %v2176 = vunpack.c.l.b16 %v2160
        %v2177 = vunpack.c.l.b16 %v2161
        %v2178 = vunpack.c.l.b16 %v2162
        %v2179 = vpack.c.b16 %v2176, %v2175
        %v2180 = vpack.c.b16 %v2178, %v2177
        %v2183 = vsel %vm2077, %v2170, 0
        %v2186 = vsel %vm1929, %v2180, 0
        %2188 = vmatpush.bf16.msra.mxu0 0
        %2189 = vmatpush.bf16.msra.mxu0 0
        %2190 = vmatpush.bf16.msra.mxu0 0
        %2191 = vmatpush.bf16.msra.mxu0 0
        %2192 = vmatpush.bf16.msra.mxu0 0
        %2193 = vmatpush.bf16.msra.mxu0 0
        %2194 = vmatpush.bf16.msra.mxu0 %v2186
        %2195 = vmatpush.bf16.msra.mxu0 %v2179
        %2196 = vmatmul.bf16.gmra.mxu0 %v2183
        %v2197 = vpop.f32.mrf.mxu0
        %v2198 = vadd.f32 %v2166, %v2197
        %v2199 = vpop.f32.mrf.mxu0
        %2200 = vdwg.mxu0
        %v2201 = vmax.f32 %v2198, 0.0
        %v2202 = vpack.c.bf16 %v2201, %v2201
        %s2203 = scalar_lea.vmem %s17, 32
        %v2204 = vld [vmem:[%s2203] sm:$0xf]
        %v2205 = vld [vmem:[%s2203 + $0x4] sm:$0xf]
        %v2206 = vld [vmem:[%s2203 + $0x8] sm:$0xf]
        %v2207 = vld [vmem:[%s2203 + $0xc] sm:$0xf]
        %v2208 = vld [vmem:[%s2203 + $0x10] sm:$0xf]
        %v2209 = vld [vmem:[%s2203 + $0x14] sm:$0xf]
        %v2210 = vld [vmem:[%s2203 + $0x18] sm:$0xf]
        %v2211 = vld [vmem:[%s2203 + $0x1c] sm:$0xf]
        %s2212 = scalar_lea.vmem [#allocation19], 1
        %v2213 = vld [vmem:[%s2212] sm:$0x1]
        %v2215 = vperm.slane %v2213, 0
        %v2225 = vunpack.c.l.b16 %v2204
        %v2226 = vunpack.c.l.b16 %v2205
        %v2227 = vunpack.c.l.b16 %v2206
        %v2228 = vunpack.c.l.b16 %v2207
        %v2229 = vunpack.c.l.b16 %v2208
        %v2230 = vunpack.c.l.b16 %v2209
        %v2231 = vunpack.c.l.b16 %v2210
        %v2232 = vunpack.c.l.b16 %v2211
        %v2233 = vpack.c.b16 %v2226, %v2225
        %v2234 = vpack.c.b16 %v2228, %v2227
        %v2235 = vpack.c.b16 %v2230, %v2229
        %v2236 = vpack.c.b16 %v2232, %v2231
        %v2242 = vsel %vm2135, %v2202, 0
        %2244 = vmatpush.bf16.msra.mxu0 0
        %2245 = vmatpush.bf16.msra.mxu0 0
        %2246 = vmatpush.bf16.msra.mxu0 0
        %2247 = vmatpush.bf16.msra.mxu0 0
        %2248 = vmatpush.bf16.msra.mxu0 %v2236
        %2249 = vmatpush.bf16.msra.mxu0 %v2235
        %2250 = vmatpush.bf16.msra.mxu0 %v2234
        %2251 = vmatpush.bf16.msra.mxu0 %v2233
        %2252 = vmatmul.bf16.gmra.mxu0 %v2242
        %v2253 = vpop.f32.mrf.mxu0
        %v2254 = vadd.f32 %v2215, %v2253
        %v2255 = vpop.f32.mrf.mxu0
        %2256 = vdwg.mxu0
        %2258 = vrot.lane.b32.xlu0 %v2254, 45
        %v2259 = vpop.permute.xlu0 %2258
        %v2261 = vadd.f32 %v2156, %v2259
        %v2262 = vpack.c.bf16 %v2261, %v2261
        %s2263 = scalar_lea.vmem [#allocation16], 32
        %v2264 = vld [vmem:[%s2263] sm:$0xf]
        %v2265 = vld [vmem:[%s2263 + $0x4] sm:$0xf]
        %v2266 = vld [vmem:[%s2263 + $0x8] sm:$0xf]
        %v2267 = vld [vmem:[%s2263 + $0xc] sm:$0x3]
        %s2268 = scalar_lea.vmem [#allocation18], 2
        %v2269 = vld [vmem:[%s2268] sm:$0x1]
        %v2271 = vperm.slane %v2269, 0
        %2274 = vrot.lane.b32.xlu0 %v2262, 83
        %v2275 = vpop.permute.xlu0 %2274
        %v2280 = vunpack.c.l.b16 %v2264
        %v2281 = vunpack.c.l.b16 %v2265
        %v2282 = vunpack.c.l.b16 %v2266
        %v2283 = vunpack.c.l.b16 %v2267
        %v2284 = vpack.c.b16 %v2281, %v2280
        %v2285 = vpack.c.b16 %v2283, %v2282
        %v2288 = vsel %vm2077, %v2275, 0
        %v2291 = vsel %vm1929, %v2285, 0
        %2293 = vmatpush.bf16.msra.mxu0 0
        %2294 = vmatpush.bf16.msra.mxu0 0
        %2295 = vmatpush.bf16.msra.mxu0 0
        %2296 = vmatpush.bf16.msra.mxu0 0
        %2297 = vmatpush.bf16.msra.mxu0 0
        %2298 = vmatpush.bf16.msra.mxu0 0
        %2299 = vmatpush.bf16.msra.mxu0 %v2291
        %2300 = vmatpush.bf16.msra.mxu0 %v2284
        %2301 = vmatmul.bf16.gmra.mxu0 %v2288
        %v2302 = vpop.f32.mrf.mxu0
        %v2303 = vadd.f32 %v2271, %v2302
        %v2304 = vpop.f32.mrf.mxu0
        %2305 = vdwg.mxu0
        %v2306 = vmax.f32 %v2303, 0.0
        %v2307 = vpack.c.bf16 %v2306, %v2306
        %s2308 = scalar_lea.vmem %s17, 64
        %v2309 = vld [vmem:[%s2308] sm:$0xf]
        %v2310 = vld [vmem:[%s2308 + $0x4] sm:$0xf]
        %v2311 = vld [vmem:[%s2308 + $0x8] sm:$0xf]
        %v2312 = vld [vmem:[%s2308 + $0xc] sm:$0xf]
        %v2313 = vld [vmem:[%s2308 + $0x10] sm:$0xf]
        %v2314 = vld [vmem:[%s2308 + $0x14] sm:$0xf]
        %v2315 = vld [vmem:[%s2308 + $0x18] sm:$0xf]
        %v2316 = vld [vmem:[%s2308 + $0x1c] sm:$0xf]
        %s2317 = scalar_lea.vmem [#allocation19], 2
        %v2318 = vld [vmem:[%s2317] sm:$0x1]
        %v2320 = vperm.slane %v2318, 0
        %v2330 = vunpack.c.l.b16 %v2309
        %v2331 = vunpack.c.l.b16 %v2310
        %v2332 = vunpack.c.l.b16 %v2311
        %v2333 = vunpack.c.l.b16 %v2312
        %v2334 = vunpack.c.l.b16 %v2313
        %v2335 = vunpack.c.l.b16 %v2314
        %v2336 = vunpack.c.l.b16 %v2315
        %v2337 = vunpack.c.l.b16 %v2316
        %v2338 = vpack.c.b16 %v2331, %v2330
        %v2339 = vpack.c.b16 %v2333, %v2332
        %v2340 = vpack.c.b16 %v2335, %v2334
        %v2341 = vpack.c.b16 %v2337, %v2336
        %v2347 = vsel %vm2135, %v2307, 0
        %2349 = vmatpush.bf16.msra.mxu0 0
        %2350 = vmatpush.bf16.msra.mxu0 0
        %2351 = vmatpush.bf16.msra.mxu0 0
        %2352 = vmatpush.bf16.msra.mxu0 0
        %2353 = vmatpush.bf16.msra.mxu0 %v2341
        %2354 = vmatpush.bf16.msra.mxu0 %v2340
        %2355 = vmatpush.bf16.msra.mxu0 %v2339
        %2356 = vmatpush.bf16.msra.mxu0 %v2338
        %2357 = vmatmul.bf16.gmra.mxu0 %v2347
        %v2358 = vpop.f32.mrf.mxu0
        %v2359 = vadd.f32 %v2320, %v2358
        %v2360 = vpop.f32.mrf.mxu0
        %2361 = vdwg.mxu0
        %2363 = vrot.lane.b32.xlu0 %v2359, 45
        %v2364 = vpop.permute.xlu0 %2363
        %v2366 = vadd.f32 %v2261, %v2364
        %2368 = vrot.lane.b32.xlu0 %v1951, 12
        %v2369 = vpop.permute.xlu0 %2368
        %2372 = vrot.lane.b32.xlu0 %v2051, 17
        %v2373 = vpop.permute.xlu0 %2372
        %2376 = vrot.lane.b32.xlu0 %v2053, 22
        %v2377 = vpop.permute.xlu0 %2376
        %2379 = vrot.lane.b32.xlu0 %v1953, 22
        %v2380 = vpop.permute.xlu0 %2379
        %2382 = vrot.lane.b32.xlu0 %v1971, 22
        %v2383 = vpop.permute.xlu0 %2382
        %2386 = vrot.lane.b32.xlu0 %v2366, 22
        %v2387 = vpop.permute.xlu0 %2386
        %v2389 = vsel %vm1925, %v1888, %v1908
        %vm2390 = vcmask 97280
        %v2391 = vsel %vm2390, %v2389, %v2369
        %vm2392 = vcmask 138240
        %v2393 = vsel %vm2392, %v2391, %v2373
        %vm2394 = vcmask 179200
        %v2395 = vsel %vm2394, %v2393, %v2377
        %vm2396 = vcmask 220160
        %v2397 = vsel %vm2396, %v2395, %v2380
        %vm2398 = vcmask 384000
        %v2399 = vsel %vm2398, %v2397, %v2383
        %vm2400 = vcmask 547840
        %v2401 = vsel %vm2400, %v2399, %v2387
        %vm2402 = vcmask 777216
        %v2403 = vsel %vm2402, %v2401, 0.0
        %2404 = vst [vmem:[%s835] sm:$0xff] %v2403
        %p2405 = scmp.lt.s32.totalorder %s41, 0
        %s2406 = scalar_select %p2405, %s41, 0
        %p2407 = scmp.lt.s32.totalorder %s42, 1
        %s2408 = scalar_select %p2407, %s42, 1
        %s2409 = smul.addr %s2406, 2
        %s2410 = sadd.s32 %s2408, %s2409
        %s2411 = smul.addr %s2410, 8
        %s2412 = scalar_lea.vmem %s19, %s2411
        // Predicated region
        $region145: #{forward.1} parent=95 // pred_check
          %p2413 = pneg %p480
        $region146: #{forward.1} parent=95 // pred_check_branch
          %2415 = sbr.rel (%p2413) target = $region148
        $region147: #{forward.1} parent=95 // pred_region
          _
        $region148: #{forward.1} parent=95 // pred_fallthru
          _
      $region96: #{forward.1} parent=5 // pred_fallthru
        _
      %p2416 = scmp.le.s32.totalorder 2, %s32
      // Predicated region
      $region149: #{forward.1} parent=5 // pred_check
        %p2417 = pneg %p2416
      $region150: #{forward.1} parent=5 // pred_check_branch
        %2419 = sbr.rel (%p2417) target = $region152
      $region151: #{forward.1} parent=5 // pred_region
        %s2420 = ssub.s32 %s32, 2
        // Predicated region
        $region153: #{forward.1} parent=151 // pred_check
          %p2421 = pneg %p486
        $region154: #{forward.1} parent=151 // pred_check_branch
          %2423 = sbr.rel (%p2421) target = $region156
        $region155: #{forward.1} parent=151 // pred_region
          %p2424 = scmp.lt.s32.totalorder %s43, 0
          %s2425 = scalar_select %p2424, %s43, 0
          %p2426 = scmp.lt.s32.totalorder %s44, 1
          %s2427 = scalar_select %p2426, %s44, 1
          %s2428 = smul.addr %s2425, 2
          %s2429 = sadd.s32 %s2427, %s2428
          %s2430 = smul.addr %s2429, 8
          %s2431 = scalar_lea.vmem %s19, %s2430
        $region156: #{forward.1} parent=151 // pred_fallthru
          _
      $region152: #{forward.1} parent=5 // pred_fallthru
        _
    $region6: #{forward.1} parent=1 // loop_footer
      %s36 = sadd.s32 1, %s32
    $region7: #{forward.1} parent=1 // loop_footer_branch
      %31 = sbr.rel target = $region3
    $region8: #{forward.1} parent=1 // loop_exit
      _
    %2432 = vsyncpa [#allocation3], 1
    %s2433 = scalar_lea.sflag [#allocation3], 1
    %2434 = vsyncpa %s2433, 1
    %2435 = vsyncpa [#allocation5], 1
    %2436 = vsyncpa [#allocation8], 1
    %2437 = vsyncpa [#allocation11], 1
    %2438 = vsyncpa [#allocation14], 1
    %2439 = vsyncpa [#allocation17], 1
    %2440 = vsyncpa [#allocation20], 1

</llo_original>
